<compile_context>
chip_gen: v7x
topology: tpu7x:2x2x1
jax: 0.10.0
libtpu: 0.0.40
codegen_flags: <defaults>
</compile_context>

<pallas_src>
import jax
import jax.numpy as jnp
import numpy as np
from jax.experimental import pallas as pl
from jax.experimental.pallas import tpu as pltpu


# ----------------------------------------------------------------------------
# Fused kernel: control branches + unet + skip reduction + CFG combine
# ----------------------------------------------------------------------------
def uc1b_fused_kernel(un_scale_ref, x_ref, h_ref, bias_c_ref, bias_u_ref,
                      wc_ref, wu_ref, wv_ref, o_ref):
    """Everything in one VMEM-resident pass.

    x_ref, h_ref : [T, C]     token-major activations (rows [0,T/2)=cond, rest=uncond)
    bias_c_ref   : [2, 13C]   per-batch control bias  (bc[i] + emb_c, branch-concat)
    bias_u_ref   : [2, C]     per-batch unet bias     (emb_u)
    wc_ref       : [C, 13C]   concat_i Wc[i] along output channels
    wu_ref       : [C, C]
    wv_ref       : [13C, C]   concat_i (control_scale[i] * Wv[i]) along input channels
    o_ref        : [T//2, C]  CFG-combined output
    """
    T, C = x_ref.shape
    half = o_ref.shape[0]
    K = wc_ref.shape[1]                       # 13 * C

    x = x_ref[...]
    xh = x + h_ref[...]                        # computed once (not per branch)

    # Broadcast the per-batch biases across each batch-half's tokens.
    row = jax.lax.broadcasted_iota(jnp.int32, (T, 1), 0)
    is_cond = row < half
    bias_c = jnp.where(is_cond,
                       jnp.broadcast_to(bias_c_ref[0:1, :], (T, K)),
                       jnp.broadcast_to(bias_c_ref[1:2, :], (T, K)))
    bias_u = jnp.where(is_cond,
                       jnp.broadcast_to(bias_u_ref[0:1, :], (T, C)),
                       jnp.broadcast_to(bias_u_ref[1:2, :], (T, C)))

    # All 13 control branches as ONE MXU matmul:  [T, C] @ [C, 13C]
    hidden = jnp.maximum(
        jnp.dot(xh, wc_ref[...], preferred_element_type=jnp.float32) + bias_c,
        0.0)

    # unet 1x1-conv + all 13 (pre-scaled) control-skip reductions: two matmuls.
    acc = jnp.dot(x, wu_ref[...], preferred_element_type=jnp.float32) + bias_u
    acc = acc + jnp.dot(hidden, wv_ref[...], preferred_element_type=jnp.float32)

    # classifier-free-guidance combine on the VMEM-resident accumulator.
    mt = acc[0:half, :]
    mu = acc[half:, :]
    o_ref[...] = mu + un_scale_ref[0] * (mt - mu)


# ----------------------------------------------------------------------------
# Pallas wrapper
# ----------------------------------------------------------------------------
def _uc1b_pallas(un_s, x_tok, h_tok, bias_c2, bias_u2, Wc_cat, Wu, Wv_cat):
    T, C = x_tok.shape
    K = Wc_cat.shape[1]
    half = T // 2
    return pl.pallas_call(
        uc1b_fused_kernel,
        out_shape=jax.ShapeDtypeStruct((half, C), jnp.float32),
        grid=(1,),
        in_specs=[
            pl.BlockSpec(memory_space=pltpu.MemorySpace.SMEM),   # un_scale [1]
            pl.BlockSpec((T, C), lambda i: (0, 0)),              # x tokens
            pl.BlockSpec((T, C), lambda i: (0, 0)),              # hint tokens
            pl.BlockSpec((2, K), lambda i: (0, 0)),              # control bias [2,13C]
            pl.BlockSpec((2, C), lambda i: (0, 0)),              # unet bias    [2,C]
            pl.BlockSpec((C, K), lambda i: (0, 0)),              # Wc_cat
            pl.BlockSpec((C, C), lambda i: (0, 0)),              # Wu
            pl.BlockSpec((K, C), lambda i: (0, 0)),              # Wv_cat (scale folded in)
        ],
        out_specs=pl.BlockSpec((half, C), lambda i: (0, 0)),
        compiler_params=pltpu.CompilerParams(
            dimension_semantics=("arbitrary",)),
    )(un_s, x_tok, h_tok, bias_c2, bias_u2, Wc_cat, Wu, Wv_cat)


def _nchw_to_tok(a):
    n, c, h, w = a.shape
    return a.transpose(0, 2, 3, 1).reshape(n * h * w, c)


def uc1b_forward(params, x, t, h_t, h_u, c_t, c_u, control_scale, un_scale,
                 only_mid_control=False):
    # TODO(synk): only_mid_control=True path (drop all but the mid control skip) not implemented.
    del only_mid_control
    x_cat = jnp.concatenate([x, x], 0)                    # [2B, C, H, W]
    h_cat = jnp.concatenate([h_t, h_u], 0)                # [2B, C, H, W]
    c_cat = jnp.concatenate([c_t, c_u], 0)                # [2B, S, D]

    N, C, H, W = x_cat.shape
    x_tok = _nchw_to_tok(x_cat)                           # [T, C], T = 2B*H*W
    h_tok = _nchw_to_tok(h_cat)

    # tiny timestep / context embedding glue — kept per-batch ([2, C]); the
    # kernel broadcasts across tokens (no [T, C] HBM materialization).
    temb = jnp.sin(t[0] * params["t_freq"])                             # [C]
    cemb = jnp.mean(c_cat, axis=1) @ params["Wctx"]                     # [2B, C]
    emb_c2 = temb[None, :] + cemb                                       # [2, C]
    emb_u2 = emb_c2 + params["bu"][None, :]                             # [2, C]

    n_ctrl = params["Wc"].shape[0]                                      # 13
    K = n_ctrl * C

    # --- one-time algebraic fusion of the 13 control branches (outside kernel) ---
    # Wc_cat[:, i*C:(i+1)*C] = Wc[i]  -> all control matmuls become one [T,C]@[C,13C]
    Wc_cat = jnp.transpose(params["Wc"], (1, 0, 2)).reshape(C, K)
    # fold control_scale into the skip weights:  scale*relu(.)@Wv == relu(.)@(scale*Wv)
    Wv_cat = (control_scale.astype(jnp.float32)[:, None, None]
              * params["Wv"]).reshape(K, C)
    # per-batch control bias (bc[i] + emb_c), branch-concatenated -> [2, 13C]
    bias_c2 = params["bc"].reshape(1, K) + jnp.tile(emb_c2, (1, n_ctrl))
    bias_u2 = emb_u2                                                    # [2, C]

    un_s = jnp.asarray(un_scale, jnp.float32).reshape(1)

    out_tok = _uc1b_pallas(un_s, x_tok, h_tok, bias_c2, bias_u2,
                           Wc_cat, params["Wu"], Wv_cat)                # [H*W, C]
    # Module semantics index m_cat[0]/m_cat[1], so x batch is 1 -> output [1,C,H,W].
    return out_tok.reshape(1, H, W, C).transpose(0, 3, 1, 2)


# ----------------------------------------------------------------------------
# Pure-JAX reference (same synthetic sub-models, unfused per-branch math)
# ----------------------------------------------------------------------------
def _ref_forward(params, x, t, h_t, h_u, c_t, c_u, control_scale, un_scale):
    x_cat = jnp.concatenate([x, x], 0)
    h_cat = jnp.concatenate([h_t, h_u], 0)
    c_cat = jnp.concatenate([c_t, c_u], 0)
    N, C, H, W = x_cat.shape
    x_tok = _nchw_to_tok(x_cat)
    h_tok = _nchw_to_tok(h_cat)
    temb = jnp.sin(t[0] * params["t_freq"])
    cemb = jnp.mean(c_cat, axis=1) @ params["Wctx"]
    emb_c = jnp.repeat(temb[None, :] + cemb, H * W, axis=0)
    emb_u = jnp.repeat(temb[None, :] + cemb + params["bu"][None, :], H * W, axis=0)
    xh = x_tok + h_tok
    acc = x_tok @ params["Wu"] + emb_u
    for i in range(13):
        ci = control_scale[i] * jnp.maximum(
            xh @ params["Wc"][i] + params["bc"][i] + emb_c, 0.0)
        acc = acc + ci @ params["Wv"][i]
    half = H * W
    mt, mu = acc[:half], acc[half:]
    out_tok = mu + un_scale * (mt - mu)
    return out_tok.reshape(1, H, W, C).transpose(0, 3, 1, 2)


# ----------------------------------------------------------------------------
def make_params(key, C, D):
    ks = jax.random.split(key, 6)
    return {
        "Wc": 0.10 * jax.random.normal(ks[0], (13, C, C), jnp.float32),
        "bc": 0.01 * jax.random.normal(ks[1], (13, 1, C), jnp.float32),
        "Wv": 0.05 * jax.random.normal(ks[2], (13, C, C), jnp.float32),
        "Wu": 0.10 * jax.random.normal(ks[3], (C, C), jnp.float32),
        "Wctx": 0.10 * jax.random.normal(ks[4], (D, C), jnp.float32),
        "bu": 0.01 * jax.random.normal(ks[5], (C,), jnp.float32),
        "t_freq": jnp.linspace(0.1, 2.0, C, dtype=jnp.float32),
    }


if __name__ == "__main__":
    key = jax.random.PRNGKey(0)
    B, C, H, W, S, D = 1, 32, 8, 8, 8, 32

    kx, kht, khu, kct, kcu, kp = jax.random.split(key, 6)
    x = jax.random.normal(kx, (B, C, H, W), jnp.float32)
    h_t = jax.random.normal(kht, (B, C, H, W), jnp.float32)
    h_u = jax.random.normal(khu, (B, C, H, W), jnp.float32)
    c_t = jax.random.normal(kct, (B, S, D), jnp.float32)
    c_u = jax.random.normal(kcu, (B, S, D), jnp.float32)
    t = jnp.array([37.0], jnp.float32)
    control_scale = jnp.linspace(0.5, 1.5, 13, dtype=jnp.float32)
    un_scale = jnp.float32(7.5)

    params = make_params(kp, C, D)

    out = uc1b_forward(params, x, t, h_t, h_u, c_t, c_u, control_scale, un_scale)
    out = jax.block_until_ready(out)

    ref = _ref_forward(params, x, t, h_t, h_u, c_t, c_u, control_scale, un_scale)
    np.testing.assert_allclose(np.asarray(out), np.asarray(ref),
                               rtol=1e-2, atol=1e-2)
    assert out.shape == (1, C, H, W)
    print("KERNEL_OK")
</pallas_src>

<mosaic_0001>
module attributes {stable_mosaic.version = 11 : i64} {
  func.func @uc1b_fused_kernel(%arg0: i32, %arg1: memref<1xf32, #tpu.memory_space<smem>>, %arg2: memref<128x32xf32, #tpu.memory_space<vmem>>, %arg3: memref<128x32xf32, #tpu.memory_space<vmem>>, %arg4: memref<2x416xf32, #tpu.memory_space<vmem>>, %arg5: memref<2x32xf32, #tpu.memory_space<vmem>>, %arg6: memref<32x416xf32, #tpu.memory_space<vmem>>, %arg7: memref<32x32xf32, #tpu.memory_space<vmem>>, %arg8: memref<416x32xf32, #tpu.memory_space<vmem>>, %arg9: memref<64x32xf32, #tpu.memory_space<vmem>>) attributes {dimension_semantics = [#tpu.dimension_semantics<arbitrary>], iteration_bounds = array<i64: 1>, scalar_prefetch = 0 : i64, scratch_operands = 0 : i64, tpu.core_type = #tpu.core_type<tc>, window_params = [{transform_indices = @transform_0, window_bounds = array<i64: 1>}, {pipeline_mode = #tpu.pipeline_mode<synchronous>, transform_indices = @transform_1, window_bounds = array<i64: 128, 32>}, {pipeline_mode = #tpu.pipeline_mode<synchronous>, transform_indices = @transform_2, window_bounds = array<i64: 128, 32>}, {pipeline_mode = #tpu.pipeline_mode<synchronous>, transform_indices = @transform_3, window_bounds = array<i64: 2, 416>}, {pipeline_mode = #tpu.pipeline_mode<synchronous>, transform_indices = @transform_4, window_bounds = array<i64: 2, 32>}, {pipeline_mode = #tpu.pipeline_mode<synchronous>, transform_indices = @transform_5, window_bounds = array<i64: 32, 416>}, {pipeline_mode = #tpu.pipeline_mode<synchronous>, transform_indices = @transform_6, window_bounds = array<i64: 32, 32>}, {pipeline_mode = #tpu.pipeline_mode<synchronous>, transform_indices = @transform_7, window_bounds = array<i64: 416, 32>}, {pipeline_mode = #tpu.pipeline_mode<synchronous>, transform_indices = @transform_8, window_bounds = array<i64: 64, 32>}]} {
    %c0 = arith.constant 0 : index
    %c0_0 = arith.constant 0 : index
    %0 = vector.load %arg2[%c0, %c0_0] : memref<128x32xf32, #tpu.memory_space<vmem>>, vector<128x32xf32>
    %c0_1 = arith.constant 0 : index
    %c0_2 = arith.constant 0 : index
    %1 = vector.load %arg3[%c0_1, %c0_2] : memref<128x32xf32, #tpu.memory_space<vmem>>, vector<128x32xf32>
    %2 = arith.addf %0, %1 : vector<128x32xf32>
    %3 = tpu.iota {dimensions = array<i32: 0>} : vector<128x1xi32>
    %c64_i32 = arith.constant 64 : i32
    %4 = vector.broadcast %c64_i32 : i32 to vector<128x1xi32>
    %5 = arith.cmpi slt, %3, %4 : vector<128x1xi32>
    %c0_3 = arith.constant 0 : index
    %c0_4 = arith.constant 0 : index
    %6 = vector.load %arg4[%c0_3, %c0_4] : memref<2x416xf32, #tpu.memory_space<vmem>>, vector<1x416xf32>
    %7 = vector.shape_cast %6 : vector<1x416xf32> to vector<1x416xf32>
    %8 = vector.broadcast %7 : vector<1x416xf32> to vector<128x416xf32>
    %c1 = arith.constant 1 : index
    %c0_5 = arith.constant 0 : index
    %9 = vector.load %arg4[%c1, %c0_5] : memref<2x416xf32, #tpu.memory_space<vmem>>, vector<1x416xf32>
    %10 = vector.shape_cast %9 : vector<1x416xf32> to vector<1x416xf32>
    %11 = vector.broadcast %10 : vector<1x416xf32> to vector<128x416xf32>
    %12 = vector.shape_cast %5 : vector<128x1xi1> to vector<128x1xi1>
    %13 = vector.broadcast %12 : vector<128x1xi1> to vector<128x416xi1>
    %14 = arith.select %13, %8, %11 : vector<128x416xi1>, vector<128x416xf32>
    %c0_6 = arith.constant 0 : index
    %c0_7 = arith.constant 0 : index
    %15 = vector.load %arg5[%c0_6, %c0_7] : memref<2x32xf32, #tpu.memory_space<vmem>>, vector<1x32xf32>
    %16 = vector.shape_cast %15 : vector<1x32xf32> to vector<1x32xf32>
    %17 = vector.broadcast %16 : vector<1x32xf32> to vector<128x32xf32>
    %c1_8 = arith.constant 1 : index
    %c0_9 = arith.constant 0 : index
    %18 = vector.load %arg5[%c1_8, %c0_9] : memref<2x32xf32, #tpu.memory_space<vmem>>, vector<1x32xf32>
    %19 = vector.shape_cast %18 : vector<1x32xf32> to vector<1x32xf32>
    %20 = vector.broadcast %19 : vector<1x32xf32> to vector<128x32xf32>
    %21 = vector.shape_cast %5 : vector<128x1xi1> to vector<128x1xi1>
    %22 = vector.broadcast %21 : vector<128x1xi1> to vector<128x32xi1>
    %23 = arith.select %22, %17, %20 : vector<128x32xi1>, vector<128x32xf32>
    %c0_10 = arith.constant 0 : index
    %c0_11 = arith.constant 0 : index
    %24 = vector.load %arg6[%c0_10, %c0_11] : memref<32x416xf32, #tpu.memory_space<vmem>>, vector<32x416xf32>
    %cst = arith.constant dense<0.000000e+00> : vector<128x416xf32>
    %25 = tpu.matmul %2, %24, %cst {dimension_numbers = #tpu.dot_dimension_numbers<[1], [0], [0], [1], [0, 0, 1, 1], [], []>} : vector<128x32xf32>, vector<32x416xf32>, vector<128x416xf32> -> vector<128x416xf32>
    %26 = arith.addf %25, %14 : vector<128x416xf32>
    %cst_12 = arith.constant 0.000000e+00 : f32
    %27 = vector.broadcast %cst_12 : f32 to vector<128x416xf32>
    %28 = arith.maximumf %26, %27 : vector<128x416xf32>
    %c0_13 = arith.constant 0 : index
    %c0_14 = arith.constant 0 : index
    %29 = vector.load %arg7[%c0_13, %c0_14] : memref<32x32xf32, #tpu.memory_space<vmem>>, vector<32x32xf32>
    %cst_15 = arith.constant dense<0.000000e+00> : vector<128x32xf32>
    %30 = tpu.matmul %0, %29, %cst_15 {dimension_numbers = #tpu.dot_dimension_numbers<[1], [0], [0], [1], [0, 0, 1, 1], [], []>} : vector<128x32xf32>, vector<32x32xf32>, vector<128x32xf32> -> vector<128x32xf32>
    %31 = arith.addf %30, %23 : vector<128x32xf32>
    %c0_16 = arith.constant 0 : index
    %c0_17 = arith.constant 0 : index
    %32 = vector.load %arg8[%c0_16, %c0_17] : memref<416x32xf32, #tpu.memory_space<vmem>>, vector<416x32xf32>
    %cst_18 = arith.constant dense<0.000000e+00> : vector<128x32xf32>
    %33 = tpu.matmul %28, %32, %cst_18 {dimension_numbers = #tpu.dot_dimension_numbers<[1], [0], [0], [1], [0, 0, 1, 1], [], []>} : vector<128x416xf32>, vector<416x32xf32>, vector<128x32xf32> -> vector<128x32xf32>
    %34 = arith.addf %31, %33 : vector<128x32xf32>
    %35 = vector.extract_strided_slice %34 {offsets = [0, 0], sizes = [64, 32], strides = [1, 1]} : vector<128x32xf32> to vector<64x32xf32>
    %36 = vector.extract_strided_slice %34 {offsets = [64, 0], sizes = [64, 32], strides = [1, 1]} : vector<128x32xf32> to vector<64x32xf32>
    %c0_19 = arith.constant 0 : index
    %37 = memref.load %arg1[%c0_19] : memref<1xf32, #tpu.memory_space<smem>>
    %38 = arith.subf %35, %36 : vector<64x32xf32>
    %39 = vector.broadcast %37 : f32 to vector<64x32xf32>
    %40 = arith.mulf %39, %38 : vector<64x32xf32>
    %41 = arith.addf %36, %40 : vector<64x32xf32>
    %c0_20 = arith.constant 0 : index
    %c0_21 = arith.constant 0 : index
    %42 = vector.load %arg9[%c0_20, %c0_21] : memref<64x32xf32, #tpu.memory_space<vmem>>, vector<64x32xf32>
    tpu.vector_store %arg9[%c0_20, %c0_21], %41 {strides = array<i32>} : memref<64x32xf32, #tpu.memory_space<vmem>>, vector<64x32xf32>,
    return
  }
  func.func @transform_0(%arg0: i32) -> i32 {
    %c0_i32 = arith.constant 0 : i32
    %c0_i32_0 = arith.constant 0 : i32
    return %c0_i32 : i32
  }
  func.func @transform_1(%arg0: i32) -> (i32, i32) {
    %c0_i32 = arith.constant 0 : i32
    %c0_i32_0 = arith.constant 0 : i32
    %c0_i32_1 = arith.constant 0 : i32
    return %c0_i32, %c0_i32_0 : i32, i32
  }
  func.func @transform_2(%arg0: i32) -> (i32, i32) {
    %c0_i32 = arith.constant 0 : i32
    %c0_i32_0 = arith.constant 0 : i32
    %c0_i32_1 = arith.constant 0 : i32
    return %c0_i32, %c0_i32_0 : i32, i32
  }
  func.func @transform_3(%arg0: i32) -> (i32, i32) {
    %c0_i32 = arith.constant 0 : i32
    %c0_i32_0 = arith.constant 0 : i32
    %c0_i32_1 = arith.constant 0 : i32
    return %c0_i32, %c0_i32_0 : i32, i32
  }
  func.func @transform_4(%arg0: i32) -> (i32, i32) {
    %c0_i32 = arith.constant 0 : i32
    %c0_i32_0 = arith.constant 0 : i32
    %c0_i32_1 = arith.constant 0 : i32
    return %c0_i32, %c0_i32_0 : i32, i32
  }
  func.func @transform_5(%arg0: i32) -> (i32, i32) {
    %c0_i32 = arith.constant 0 : i32
    %c0_i32_0 = arith.constant 0 : i32
    %c0_i32_1 = arith.constant 0 : i32
    return %c0_i32, %c0_i32_0 : i32, i32
  }
  func.func @transform_6(%arg0: i32) -> (i32, i32) {
    %c0_i32 = arith.constant 0 : i32
    %c0_i32_0 = arith.constant 0 : i32
    %c0_i32_1 = arith.constant 0 : i32
    return %c0_i32, %c0_i32_0 : i32, i32
  }
  func.func @transform_7(%arg0: i32) -> (i32, i32) {
    %c0_i32 = arith.constant 0 : i32
    %c0_i32_0 = arith.constant 0 : i32
    %c0_i32_1 = arith.constant 0 : i32
    return %c0_i32, %c0_i32_0 : i32, i32
  }
  func.func @transform_8(%arg0: i32) -> (i32, i32) {
    %c0_i32 = arith.constant 0 : i32
    %c0_i32_0 = arith.constant 0 : i32
    %c0_i32_1 = arith.constant 0 : i32
    return %c0_i32, %c0_i32_0 : i32, i32
  }
}

</mosaic_0001>

<llo_original>
// kernel: tpu_custom_call.1
$region0: #{tpu_custom_call.1}
  #allocation0 [shape = 'u32[]', space=smem, size = 0x4, offset = 0x4, fixed_abs, tag = 'smem constant byte address 0x4 - core index']
  #allocation1 [shape = 'u32[144,128]{1,0:T(1,128)}', space=vmem, size = 0x12000, scoped, tag = 'internal scratch']
  #allocation2 [shape = 'f32[1]{0:T(128)S(6)}', space=smem, size = 0x200, scoped, tag = 'scoped memory for tpu_custom_call.1']
  %s0 = inlined_call_operand.<no memory space> [shape: f32[1], index: 0, kind: input, shape index: {}]
  %s1 = inlined_call_operand.vmem [shape: f32[128,32], index: 1, kind: input, shape index: {}]
  %s2 = inlined_call_operand.vmem [shape: f32[128,32], index: 2, kind: input, shape index: {}]
  %s3 = inlined_call_operand.vmem [shape: f32[2,416], index: 3, kind: input, shape index: {}]
  %s4 = inlined_call_operand.vmem [shape: f32[2,32], index: 4, kind: input, shape index: {}]
  %s5 = inlined_call_operand.vmem [shape: f32[32,416], index: 5, kind: input, shape index: {}]
  %s6 = inlined_call_operand.vmem [shape: f32[32,32], index: 6, kind: input, shape index: {}]
  %s7 = inlined_call_operand.vmem [shape: f32[416,32], index: 7, kind: input, shape index: {}]
  %s8 = inlined_call_operand.vmem [shape: f32[64,32], index: 8, kind: output, shape index: {}]
  %s9 = sld [smem:[#allocation0]]
  $region42: #{tpu_custom_call.1} parent=0
    _
  %s11 = ssub.s32 1, %s9
  %s12 = scalar_select 0, %s11, %s9
  %13 = sst [smem:[#allocation2]] %s0
  // Predicated region
  $region2: #{tpu_custom_call.1} parent=0 // pred_check
    _
  $region3: #{tpu_custom_call.1} parent=0 // pred_check_branch
    %15 = sbr.rel (0) target = $region5
  $region4: #{tpu_custom_call.1} parent=0 // pred_region
    _
  $region5: #{tpu_custom_call.1} parent=0 // pred_fallthru
    _
  // Predicated region
  $region6: #{tpu_custom_call.1} parent=0 // pred_check
    _
  $region7: #{tpu_custom_call.1} parent=0 // pred_check_branch
    %17 = sbr.rel (0) target = $region9
  $region8: #{tpu_custom_call.1} parent=0 // pred_region
    _
  $region9: #{tpu_custom_call.1} parent=0 // pred_fallthru
    _
  // Predicated region
  $region10: #{tpu_custom_call.1} parent=0 // pred_check
    _
  $region11: #{tpu_custom_call.1} parent=0 // pred_check_branch
    %19 = sbr.rel (0) target = $region13
  $region12: #{tpu_custom_call.1} parent=0 // pred_region
    _
  $region13: #{tpu_custom_call.1} parent=0 // pred_fallthru
    _
  // Predicated region
  $region14: #{tpu_custom_call.1} parent=0 // pred_check
    _
  $region15: #{tpu_custom_call.1} parent=0 // pred_check_branch
    %21 = sbr.rel (0) target = $region17
  $region16: #{tpu_custom_call.1} parent=0 // pred_region
    _
  $region17: #{tpu_custom_call.1} parent=0 // pred_fallthru
    _
  // Predicated region
  $region18: #{tpu_custom_call.1} parent=0 // pred_check
    _
  $region19: #{tpu_custom_call.1} parent=0 // pred_check_branch
    %23 = sbr.rel (0) target = $region21
  $region20: #{tpu_custom_call.1} parent=0 // pred_region
    _
  $region21: #{tpu_custom_call.1} parent=0 // pred_fallthru
    _
  // Predicated region
  $region22: #{tpu_custom_call.1} parent=0 // pred_check
    _
  $region23: #{tpu_custom_call.1} parent=0 // pred_check_branch
    %25 = sbr.rel (0) target = $region25
  $region24: #{tpu_custom_call.1} parent=0 // pred_region
    _
  $region25: #{tpu_custom_call.1} parent=0 // pred_fallthru
    _
  // Predicated region
  $region26: #{tpu_custom_call.1} parent=0 // pred_check
    _
  $region27: #{tpu_custom_call.1} parent=0 // pred_check_branch
    %27 = sbr.rel (0) target = $region29
  $region28: #{tpu_custom_call.1} parent=0 // pred_region
    _
  $region29: #{tpu_custom_call.1} parent=0 // pred_fallthru
    _
  // Predicated region
  $region30: #{tpu_custom_call.1} parent=0 // pred_check
    _
  $region31: #{tpu_custom_call.1} parent=0 // pred_check_branch
    %29 = sbr.rel (0) target = $region33
  $region32: #{tpu_custom_call.1} parent=0 // pred_region
    _
  $region33: #{tpu_custom_call.1} parent=0 // pred_fallthru
    _
  %v30 = vld [vmem:[%s1] sm:$0xff]
  %v31 = vld [vmem:[%s1 + $0x8] sm:$0xff]
  %v32 = vld [vmem:[%s1 + $0x10] sm:$0xff]
  %v33 = vld [vmem:[%s1 + $0x18] sm:$0xff]
  %v34 = vld [vmem:[%s1 + $0x20] sm:$0xff]
  %v35 = vld [vmem:[%s1 + $0x28] sm:$0xff]
  %v36 = vld [vmem:[%s1 + $0x30] sm:$0xff]
  %v37 = vld [vmem:[%s1 + $0x38] sm:$0xff]
  %v38 = vld [vmem:[%s1 + $0x40] sm:$0xff]
  %v39 = vld [vmem:[%s1 + $0x48] sm:$0xff]
  %v40 = vld [vmem:[%s1 + $0x50] sm:$0xff]
  %v41 = vld [vmem:[%s1 + $0x58] sm:$0xff]
  %v42 = vld [vmem:[%s1 + $0x60] sm:$0xff]
  %v43 = vld [vmem:[%s1 + $0x68] sm:$0xff]
  %v44 = vld [vmem:[%s1 + $0x70] sm:$0xff]
  %v45 = vld [vmem:[%s1 + $0x78] sm:$0xff]
  %v46 = vld [vmem:[%s2] sm:$0xff]
  %v47 = vld [vmem:[%s2 + $0x8] sm:$0xff]
  %v48 = vld [vmem:[%s2 + $0x10] sm:$0xff]
  %v49 = vld [vmem:[%s2 + $0x18] sm:$0xff]
  %v50 = vld [vmem:[%s2 + $0x20] sm:$0xff]
  %v51 = vld [vmem:[%s2 + $0x28] sm:$0xff]
  %v52 = vld [vmem:[%s2 + $0x30] sm:$0xff]
  %v53 = vld [vmem:[%s2 + $0x38] sm:$0xff]
  %v54 = vld [vmem:[%s2 + $0x40] sm:$0xff]
  %v55 = vld [vmem:[%s2 + $0x48] sm:$0xff]
  %v56 = vld [vmem:[%s2 + $0x50] sm:$0xff]
  %v57 = vld [vmem:[%s2 + $0x58] sm:$0xff]
  %v58 = vld [vmem:[%s2 + $0x60] sm:$0xff]
  %v59 = vld [vmem:[%s2 + $0x68] sm:$0xff]
  %v60 = vld [vmem:[%s2 + $0x70] sm:$0xff]
  %v61 = vld [vmem:[%s2 + $0x78] sm:$0xff]
  %v62 = vadd.f32 %v30, %v46
  %v63 = vadd.f32 %v31, %v47
  %v64 = vadd.f32 %v32, %v48
  %v65 = vadd.f32 %v33, %v49
  %v66 = vadd.f32 %v34, %v50
  %v67 = vadd.f32 %v35, %v51
  %v68 = vadd.f32 %v36, %v52
  %v69 = vadd.f32 %v37, %v53
  %v70 = vadd.f32 %v38, %v54
  %v71 = vadd.f32 %v39, %v55
  %v72 = vadd.f32 %v40, %v56
  %v73 = vadd.f32 %v41, %v57
  %v74 = vadd.f32 %v42, %v58
  %v75 = vadd.f32 %v43, %v59
  %v76 = vadd.f32 %v44, %v60
  %v77 = vadd.f32 %v45, %v61
  %v78 = vlaneseq
  %v79 = vshrl.u32 %v78, 7
  %v80 = vadd.s32 %v79, 8
  %v81 = vadd.s32 %v79, 16
  %v82 = vadd.s32 %v79, 24
  %v83 = vadd.s32 %v79, 32
  %v84 = vadd.s32 %v79, 40
  %v85 = vadd.s32 %v79, 48
  %v86 = vadd.s32 %v79, 56
  %v87 = vadd.s32 %v79, 64
  %v88 = vadd.s32 %v79, 72
  %v89 = vadd.s32 %v79, 80
  %v90 = vadd.s32 %v79, 88
  %v91 = vadd.s32 %v79, 96
  %v92 = vadd.s32 %v79, 104
  %v93 = vadd.s32 %v79, 112
  %v94 = vadd.s32 %v79, 120
  %vm95 = vcmp.lt.s32.totalorder %v79, 64
  %vm96 = vcmp.lt.s32.totalorder %v80, 64
  %vm97 = vcmp.lt.s32.totalorder %v81, 64
  %vm98 = vcmp.lt.s32.totalorder %v82, 64
  %vm99 = vcmp.lt.s32.totalorder %v83, 64
  %vm100 = vcmp.lt.s32.totalorder %v84, 64
  %vm101 = vcmp.lt.s32.totalorder %v85, 64
  %vm102 = vcmp.lt.s32.totalorder %v86, 64
  %vm103 = vcmp.lt.s32.totalorder %v87, 64
  %vm104 = vcmp.lt.s32.totalorder %v88, 64
  %vm105 = vcmp.lt.s32.totalorder %v89, 64
  %vm106 = vcmp.lt.s32.totalorder %v90, 64
  %vm107 = vcmp.lt.s32.totalorder %v91, 64
  %vm108 = vcmp.lt.s32.totalorder %v92, 64
  %vm109 = vcmp.lt.s32.totalorder %v93, 64
  %vm110 = vcmp.lt.s32.totalorder %v94, 64
  %v111 = vld [vmem:[%s3] ss:$2 sm:$0xf]
  %v113 = vlaneseq
  %v114 = vshrl.u32 %v113, 7
  %v115 = vsub.s32 0, %v114
  %v116 = vrot.slane %v111, %v115
  %v117 = vlaneseq
  %v118 = vshrl.u32 %v117, 7
  %v119 = vsub.s32 1, %v118
  %v120 = vrot.slane %v111, %v119
  %v121 = vlaneseq
  %v122 = vshrl.u32 %v121, 7
  %v123 = vsub.s32 2, %v122
  %v124 = vrot.slane %v111, %v123
  %v125 = vlaneseq
  %v126 = vshrl.u32 %v125, 7
  %v127 = vsub.s32 3, %v126
  %v128 = vrot.slane %v111, %v127
  %s133 = scalar_lea.vmem %s3, 1
  %v134 = vld [vmem:[%s133] ss:$2 sm:$0xf]
  %v136 = vlaneseq
  %v137 = vshrl.u32 %v136, 7
  %v138 = vsub.s32 0, %v137
  %v139 = vrot.slane %v134, %v138
  %v140 = vlaneseq
  %v141 = vshrl.u32 %v140, 7
  %v142 = vsub.s32 1, %v141
  %v143 = vrot.slane %v134, %v142
  %v144 = vlaneseq
  %v145 = vshrl.u32 %v144, 7
  %v146 = vsub.s32 2, %v145
  %v147 = vrot.slane %v134, %v146
  %v148 = vlaneseq
  %v149 = vshrl.u32 %v148, 7
  %v150 = vsub.s32 3, %v149
  %v151 = vrot.slane %v134, %v150
  %v156 = vsel %vm95, 1, 0
  %v157 = vsel %vm96, 1, 0
  %v158 = vsel %vm97, 1, 0
  %v159 = vsel %vm98, 1, 0
  %v160 = vsel %vm99, 1, 0
  %v161 = vsel %vm100, 1, 0
  %v162 = vsel %vm101, 1, 0
  %v163 = vsel %vm102, 1, 0
  %v164 = vsel %vm103, 1, 0
  %v165 = vsel %vm104, 1, 0
  %v166 = vsel %vm105, 1, 0
  %v167 = vsel %vm106, 1, 0
  %v168 = vsel %vm107, 1, 0
  %v169 = vsel %vm108, 1, 0
  %v170 = vsel %vm109, 1, 0
  %v171 = vsel %vm110, 1, 0
  %vm172 = vcmp.eq.s32.totalorder %v156, 1
  %vm173 = vcmp.eq.s32.totalorder %v157, 1
  %vm174 = vcmp.eq.s32.totalorder %v158, 1
  %vm175 = vcmp.eq.s32.totalorder %v159, 1
  %vm176 = vcmp.eq.s32.totalorder %v160, 1
  %vm177 = vcmp.eq.s32.totalorder %v161, 1
  %vm178 = vcmp.eq.s32.totalorder %v162, 1
  %vm179 = vcmp.eq.s32.totalorder %v163, 1
  %vm180 = vcmp.eq.s32.totalorder %v164, 1
  %vm181 = vcmp.eq.s32.totalorder %v165, 1
  %vm182 = vcmp.eq.s32.totalorder %v166, 1
  %vm183 = vcmp.eq.s32.totalorder %v167, 1
  %vm184 = vcmp.eq.s32.totalorder %v168, 1
  %vm185 = vcmp.eq.s32.totalorder %v169, 1
  %vm186 = vcmp.eq.s32.totalorder %v170, 1
  %vm187 = vcmp.eq.s32.totalorder %v171, 1
  %v188 = vsel %vm172, %v116, %v139
  %v189 = vsel %vm172, %v120, %v143
  %v190 = vsel %vm172, %v124, %v147
  %v191 = vsel %vm172, %v128, %v151
  %v192 = vsel %vm173, %v116, %v139
  %v193 = vsel %vm173, %v120, %v143
  %v194 = vsel %vm173, %v124, %v147
  %v195 = vsel %vm173, %v128, %v151
  %v196 = vsel %vm174, %v116, %v139
  %v197 = vsel %vm174, %v120, %v143
  %v198 = vsel %vm174, %v124, %v147
  %v199 = vsel %vm174, %v128, %v151
  %v200 = vsel %vm175, %v116, %v139
  %v201 = vsel %vm175, %v120, %v143
  %v202 = vsel %vm175, %v124, %v147
  %v203 = vsel %vm175, %v128, %v151
  %v204 = vsel %vm176, %v116, %v139
  %v205 = vsel %vm176, %v120, %v143
  %v206 = vsel %vm176, %v124, %v147
  %v207 = vsel %vm176, %v128, %v151
  %v208 = vsel %vm177, %v116, %v139
  %v209 = vsel %vm177, %v120, %v143
  %v210 = vsel %vm177, %v124, %v147
  %v211 = vsel %vm177, %v128, %v151
  %v212 = vsel %vm178, %v116, %v139
  %v213 = vsel %vm178, %v120, %v143
  %v214 = vsel %vm178, %v124, %v147
  %v215 = vsel %vm178, %v128, %v151
  %v216 = vsel %vm179, %v116, %v139
  %v217 = vsel %vm179, %v120, %v143
  %v218 = vsel %vm179, %v124, %v147
  %v219 = vsel %vm179, %v128, %v151
  %v220 = vsel %vm180, %v116, %v139
  %v221 = vsel %vm180, %v120, %v143
  %v222 = vsel %vm180, %v124, %v147
  %v223 = vsel %vm180, %v128, %v151
  %v224 = vsel %vm181, %v116, %v139
  %v225 = vsel %vm181, %v120, %v143
  %v226 = vsel %vm181, %v124, %v147
  %v227 = vsel %vm181, %v128, %v151
  %v228 = vsel %vm182, %v116, %v139
  %v229 = vsel %vm182, %v120, %v143
  %v230 = vsel %vm182, %v124, %v147
  %v231 = vsel %vm182, %v128, %v151
  %v232 = vsel %vm183, %v116, %v139
  %v233 = vsel %vm183, %v120, %v143
  %v234 = vsel %vm183, %v124, %v147
  %v235 = vsel %vm183, %v128, %v151
  %v236 = vsel %vm184, %v116, %v139
  %v237 = vsel %vm184, %v120, %v143
  %v238 = vsel %vm184, %v124, %v147
  %v239 = vsel %vm184, %v128, %v151
  %v240 = vsel %vm185, %v116, %v139
  %v241 = vsel %vm185, %v120, %v143
  %v242 = vsel %vm185, %v124, %v147
  %v243 = vsel %vm185, %v128, %v151
  %v244 = vsel %vm186, %v116, %v139
  %v245 = vsel %vm186, %v120, %v143
  %v246 = vsel %vm186, %v124, %v147
  %v247 = vsel %vm186, %v128, %v151
  %v248 = vsel %vm187, %v116, %v139
  %v249 = vsel %vm187, %v120, %v143
  %v250 = vsel %vm187, %v124, %v147
  %v251 = vsel %vm187, %v128, %v151
  %v252 = vld [vmem:[%s4] sm:$0x1]
  %v253 = vlaneseq
  %v254 = vshrl.u32 %v253, 7
  %v255 = vsub.s32 0, %v254
  %v256 = vrot.slane %v252, %v255
  %v257 = vld [vmem:[%s4 + $0x1] sm:$0x1]
  %v258 = vlaneseq
  %v259 = vshrl.u32 %v258, 7
  %v260 = vsub.s32 0, %v259
  %v261 = vrot.slane %v257, %v260
  %v262 = vsel %vm172, %v256, %v261
  %v263 = vsel %vm173, %v256, %v261
  %v264 = vsel %vm174, %v256, %v261
  %v265 = vsel %vm175, %v256, %v261
  %v266 = vsel %vm176, %v256, %v261
  %v267 = vsel %vm177, %v256, %v261
  %v268 = vsel %vm178, %v256, %v261
  %v269 = vsel %vm179, %v256, %v261
  %v270 = vsel %vm180, %v256, %v261
  %v271 = vsel %vm181, %v256, %v261
  %v272 = vsel %vm182, %v256, %v261
  %v273 = vsel %vm183, %v256, %v261
  %v274 = vsel %vm184, %v256, %v261
  %v275 = vsel %vm185, %v256, %v261
  %v276 = vsel %vm186, %v256, %v261
  %v277 = vsel %vm187, %v256, %v261
  %v278 = vld [vmem:[%s5] sm:$0xff]
  %v279 = vld [vmem:[%s5 + $0x8] sm:$0xff]
  %v280 = vld [vmem:[%s5 + $0x10] sm:$0xff]
  %v281 = vld [vmem:[%s5 + $0x18] sm:$0xff]
  %v282 = vld [vmem:[%s5 + $0x20] sm:$0xff]
  %v283 = vld [vmem:[%s5 + $0x28] sm:$0xff]
  %v284 = vld [vmem:[%s5 + $0x30] sm:$0xff]
  %v285 = vld [vmem:[%s5 + $0x38] sm:$0xff]
  %v286 = vld [vmem:[%s5 + $0x40] sm:$0xff]
  %v287 = vld [vmem:[%s5 + $0x48] sm:$0xff]
  %v288 = vld [vmem:[%s5 + $0x50] sm:$0xff]
  %v289 = vld [vmem:[%s5 + $0x58] sm:$0xff]
  %v290 = vld [vmem:[%s5 + $0x60] sm:$0xff]
  %v291 = vld [vmem:[%s5 + $0x68] sm:$0xff]
  %v292 = vld [vmem:[%s5 + $0x70] sm:$0xff]
  %v293 = vld [vmem:[%s5 + $0x78] sm:$0xff]
  %vm294 = vcmask 261120
  %v296 = vsel %vm294, %v62, 0
  %v299 = vsel %vm294, %v63, 0
  %v302 = vsel %vm294, %v64, 0
  %v305 = vsel %vm294, %v65, 0
  %v308 = vsel %vm294, %v66, 0
  %v311 = vsel %vm294, %v67, 0
  %v314 = vsel %vm294, %v68, 0
  %v317 = vsel %vm294, %v69, 0
  %v320 = vsel %vm294, %v70, 0
  %v323 = vsel %vm294, %v71, 0
  %v326 = vsel %vm294, %v72, 0
  %v329 = vsel %vm294, %v73, 0
  %v332 = vsel %vm294, %v74, 0
  %v335 = vsel %vm294, %v75, 0
  %v338 = vsel %vm294, %v76, 0
  %v341 = vsel %vm294, %v77, 0
  %343 = vmatprep.subr.mxu0 %v279
  %344 = vmatpush1.msra.mxu0 %v278
  %345 = vmatprep.subr.mxu0 %v283
  %346 = vmatpush1.msra.mxu0 %v282
  %347 = vmatprep.subr.mxu0 %v287
  %348 = vmatpush1.msra.mxu0 %v286
  %349 = vmatprep.subr.mxu0 %v291
  %350 = vmatpush1.msra.mxu0 %v290
  %351 = vmatprep.subr.mxu0 0.0
  %352 = vmatpush1.msra.mxu0 0.0
  %353 = vmatprep.subr.mxu0 0.0
  %354 = vmatpush1.msra.mxu0 0.0
  %355 = vmatprep.subr.mxu0 0.0
  %356 = vmatpush1.msra.mxu0 0.0
  %357 = vmatprep.subr.mxu0 0.0
  %358 = vmatpush1.msra.mxu0 0.0
  %359 = vmatprep.subr.mxu0 0.0
  %360 = vmatpush1.msra.mxu0 0.0
  %361 = vmatprep.subr.mxu0 0.0
  %362 = vmatpush1.msra.mxu0 0.0
  %363 = vmatprep.subr.mxu0 0.0
  %364 = vmatpush1.msra.mxu0 0.0
  %365 = vmatprep.subr.mxu0 0.0
  %366 = vmatpush1.msra.mxu0 0.0
  %367 = vmatprep.subr.mxu0 0.0
  %368 = vmatpush1.msra.mxu0 0.0
  %369 = vmatprep.subr.mxu0 0.0
  %370 = vmatpush1.msra.mxu0 0.0
  %371 = vmatprep.subr.mxu0 0.0
  %372 = vmatpush1.msra.mxu0 0.0
  %373 = vmatprep.subr.mxu0 0.0
  %374 = vmatpush1.msra.mxu0 0.0
  %375 = vmatprep.subr.mxu0 0.0
  %376 = vmatpush1.msra.mxu0 0.0
  %377 = vmatprep.subr.mxu0 0.0
  %378 = vmatpush1.msra.mxu0 0.0
  %379 = vmatprep.subr.mxu0 0.0
  %380 = vmatpush1.msra.mxu0 0.0
  %381 = vmatprep.subr.mxu0 0.0
  %382 = vmatpush1.msra.mxu0 0.0
  %383 = vmatprep.subr.mxu0 0.0
  %384 = vmatpush1.msra.mxu0 0.0
  %385 = vmatprep.subr.mxu0 0.0
  %386 = vmatpush1.msra.mxu0 0.0
  %387 = vmatprep.subr.mxu0 0.0
  %388 = vmatpush1.msra.mxu0 0.0
  %389 = vmatprep.subr.mxu0 0.0
  %390 = vmatpush1.msra.mxu0 0.0
  %391 = vmatprep.subr.mxu0 0.0
  %392 = vmatpush1.msra.mxu0 0.0
  %393 = vmatprep.subr.mxu0 0.0
  %394 = vmatpush1.msra.mxu0 0.0
  %395 = vmatprep.subr.mxu0 0.0
  %396 = vmatpush1.msra.mxu0 0.0
  %397 = vmatprep.subr.mxu0 0.0
  %398 = vmatpush1.msra.mxu0 0.0
  %399 = vmatprep.subr.mxu0 0.0
  %400 = vmatpush1.msra.mxu0 0.0
  %401 = vmatprep.subr.mxu0 0.0
  %402 = vmatpush1.msra.mxu0 0.0
  %403 = vmatprep.subr.mxu0 0.0
  %404 = vmatpush1.msra.mxu0 0.0
  %405 = vmatprep.subr.mxu0 0.0
  %406 = vmatpush1.msra.mxu0 0.0
  %407 = vmatprep.mubr.f32.mxu0 0.0
  %408 = vmatmul.mubr.f32.gmra.mrb[0].mxu0 %v296
  %v409 = vpop.f32.mrb[0].mxu0
  %v410 = vadd.f32 %v188, %v409
  %v411 = vpop.f32.mrb[0].mxu0
  %v412 = vadd.f32 %v189, %v411
  %413 = vmatprep.mubr.f32.mxu0 0.0
  %414 = vmatmul.mubr.f32.gmra.mrb[0].mxu0 %v299
  %v415 = vpop.f32.mrb[0].mxu0
  %v416 = vadd.f32 %v192, %v415
  %v417 = vpop.f32.mrb[0].mxu0
  %v418 = vadd.f32 %v193, %v417
  %419 = vmatprep.mubr.f32.mxu0 0.0
  %420 = vmatmul.mubr.f32.gmra.mrb[0].mxu0 %v302
  %v421 = vpop.f32.mrb[0].mxu0
  %v422 = vadd.f32 %v196, %v421
  %v423 = vpop.f32.mrb[0].mxu0
  %v424 = vadd.f32 %v197, %v423
  %425 = vmatprep.mubr.f32.mxu0 0.0
  %426 = vmatmul.mubr.f32.gmra.mrb[0].mxu0 %v305
  %v427 = vpop.f32.mrb[0].mxu0
  %v428 = vadd.f32 %v200, %v427
  %v429 = vpop.f32.mrb[0].mxu0
  %v430 = vadd.f32 %v201, %v429
  %431 = vmatprep.mubr.f32.mxu0 0.0
  %432 = vmatmul.mubr.f32.gmra.mrb[0].mxu0 %v308
  %v433 = vpop.f32.mrb[0].mxu0
  %v434 = vadd.f32 %v204, %v433
  %v435 = vpop.f32.mrb[0].mxu0
  %v436 = vadd.f32 %v205, %v435
  %437 = vmatprep.mubr.f32.mxu0 0.0
  %438 = vmatmul.mubr.f32.gmra.mrb[0].mxu0 %v311
  %v439 = vpop.f32.mrb[0].mxu0
  %v440 = vadd.f32 %v208, %v439
  %v441 = vpop.f32.mrb[0].mxu0
  %v442 = vadd.f32 %v209, %v441
  %443 = vmatprep.mubr.f32.mxu0 0.0
  %444 = vmatmul.mubr.f32.gmra.mrb[0].mxu0 %v314
  %v445 = vpop.f32.mrb[0].mxu0
  %v446 = vadd.f32 %v212, %v445
  %v447 = vpop.f32.mrb[0].mxu0
  %v448 = vadd.f32 %v213, %v447
  %449 = vmatprep.mubr.f32.mxu0 0.0
  %450 = vmatmul.mubr.f32.gmra.mrb[0].mxu0 %v317
  %v451 = vpop.f32.mrb[0].mxu0
  %v452 = vadd.f32 %v216, %v451
  %v453 = vpop.f32.mrb[0].mxu0
  %v454 = vadd.f32 %v217, %v453
  %455 = vmatprep.mubr.f32.mxu0 0.0
  %456 = vmatmul.mubr.f32.gmra.mrb[0].mxu0 %v320
  %v457 = vpop.f32.mrb[0].mxu0
  %v458 = vadd.f32 %v220, %v457
  %v459 = vpop.f32.mrb[0].mxu0
  %v460 = vadd.f32 %v221, %v459
  %461 = vmatprep.mubr.f32.mxu0 0.0
  %462 = vmatmul.mubr.f32.gmra.mrb[0].mxu0 %v323
  %v463 = vpop.f32.mrb[0].mxu0
  %v464 = vadd.f32 %v224, %v463
  %v465 = vpop.f32.mrb[0].mxu0
  %v466 = vadd.f32 %v225, %v465
  %467 = vmatprep.mubr.f32.mxu0 0.0
  %468 = vmatmul.mubr.f32.gmra.mrb[0].mxu0 %v326
  %v469 = vpop.f32.mrb[0].mxu0
  %v470 = vadd.f32 %v228, %v469
  %v471 = vpop.f32.mrb[0].mxu0
  %v472 = vadd.f32 %v229, %v471
  %473 = vmatprep.mubr.f32.mxu0 0.0
  %474 = vmatmul.mubr.f32.gmra.mrb[0].mxu0 %v329
  %v475 = vpop.f32.mrb[0].mxu0
  %v476 = vadd.f32 %v232, %v475
  %v477 = vpop.f32.mrb[0].mxu0
  %v478 = vadd.f32 %v233, %v477
  %479 = vmatprep.mubr.f32.mxu0 0.0
  %480 = vmatmul.mubr.f32.gmra.mrb[0].mxu0 %v332
  %v481 = vpop.f32.mrb[0].mxu0
  %v482 = vadd.f32 %v236, %v481
  %v483 = vpop.f32.mrb[0].mxu0
  %v484 = vadd.f32 %v237, %v483
  %485 = vmatprep.mubr.f32.mxu0 0.0
  %486 = vmatmul.mubr.f32.gmra.mrb[0].mxu0 %v335
  %v487 = vpop.f32.mrb[0].mxu0
  %v488 = vadd.f32 %v240, %v487
  %v489 = vpop.f32.mrb[0].mxu0
  %v490 = vadd.f32 %v241, %v489
  %491 = vmatprep.mubr.f32.mxu0 0.0
  %492 = vmatmul.mubr.f32.gmra.mrb[0].mxu0 %v338
  %v493 = vpop.f32.mrb[0].mxu0
  %v494 = vadd.f32 %v244, %v493
  %v495 = vpop.f32.mrb[0].mxu0
  %v496 = vadd.f32 %v245, %v495
  %497 = vmatprep.mubr.f32.mxu0 0.0
  %498 = vmatmul.mubr.f32.gmra.mrb[0].mxu0 %v341
  %v499 = vpop.f32.mrb[0].mxu0
  %v500 = vadd.f32 %v248, %v499
  %v501 = vpop.f32.mrb[0].mxu0
  %v502 = vadd.f32 %v249, %v501
  %503 = vdwg.mxu0
  %504 = vmatprep.subr.mxu0 %v281
  %505 = vmatpush1.msra.mxu0 %v280
  %506 = vmatprep.subr.mxu0 %v285
  %507 = vmatpush1.msra.mxu0 %v284
  %508 = vmatprep.subr.mxu0 %v289
  %509 = vmatpush1.msra.mxu0 %v288
  %510 = vmatprep.subr.mxu0 %v293
  %511 = vmatpush1.msra.mxu0 %v292
  %512 = vmatprep.subr.mxu0 0.0
  %513 = vmatpush1.msra.mxu0 0.0
  %514 = vmatprep.subr.mxu0 0.0
  %515 = vmatpush1.msra.mxu0 0.0
  %516 = vmatprep.subr.mxu0 0.0
  %517 = vmatpush1.msra.mxu0 0.0
  %518 = vmatprep.subr.mxu0 0.0
  %519 = vmatpush1.msra.mxu0 0.0
  %520 = vmatprep.subr.mxu0 0.0
  %521 = vmatpush1.msra.mxu0 0.0
  %522 = vmatprep.subr.mxu0 0.0
  %523 = vmatpush1.msra.mxu0 0.0
  %524 = vmatprep.subr.mxu0 0.0
  %525 = vmatpush1.msra.mxu0 0.0
  %526 = vmatprep.subr.mxu0 0.0
  %527 = vmatpush1.msra.mxu0 0.0
  %528 = vmatprep.subr.mxu0 0.0
  %529 = vmatpush1.msra.mxu0 0.0
  %530 = vmatprep.subr.mxu0 0.0
  %531 = vmatpush1.msra.mxu0 0.0
  %532 = vmatprep.subr.mxu0 0.0
  %533 = vmatpush1.msra.mxu0 0.0
  %534 = vmatprep.subr.mxu0 0.0
  %535 = vmatpush1.msra.mxu0 0.0
  %536 = vmatprep.subr.mxu0 0.0
  %537 = vmatpush1.msra.mxu0 0.0
  %538 = vmatprep.subr.mxu0 0.0
  %539 = vmatpush1.msra.mxu0 0.0
  %540 = vmatprep.subr.mxu0 0.0
  %541 = vmatpush1.msra.mxu0 0.0
  %542 = vmatprep.subr.mxu0 0.0
  %543 = vmatpush1.msra.mxu0 0.0
  %544 = vmatprep.subr.mxu0 0.0
  %545 = vmatpush1.msra.mxu0 0.0
  %546 = vmatprep.subr.mxu0 0.0
  %547 = vmatpush1.msra.mxu0 0.0
  %548 = vmatprep.subr.mxu0 0.0
  %549 = vmatpush1.msra.mxu0 0.0
  %550 = vmatprep.subr.mxu0 0.0
  %551 = vmatpush1.msra.mxu0 0.0
  %552 = vmatprep.subr.mxu0 0.0
  %553 = vmatpush1.msra.mxu0 0.0
  %554 = vmatprep.subr.mxu0 0.0
  %555 = vmatpush1.msra.mxu0 0.0
  %556 = vmatprep.subr.mxu0 0.0
  %557 = vmatpush1.msra.mxu0 0.0
  %558 = vmatprep.subr.mxu0 0.0
  %559 = vmatpush1.msra.mxu0 0.0
  %560 = vmatprep.subr.mxu0 0.0
  %561 = vmatpush1.msra.mxu0 0.0
  %562 = vmatprep.subr.mxu0 0.0
  %563 = vmatpush1.msra.mxu0 0.0
  %564 = vmatprep.subr.mxu0 0.0
  %565 = vmatpush1.msra.mxu0 0.0
  %566 = vmatprep.subr.mxu0 0.0
  %567 = vmatpush1.msra.mxu0 0.0
  %568 = vmatprep.mubr.f32.mxu0 0.0
  %569 = vmatmul.mubr.f32.gmra.mrb[0].mxu0 %v296
  %v570 = vpop.f32.mrb[0].mxu0
  %v571 = vadd.f32 %v190, %v570
  %v572 = vpop.f32.mrb[0].mxu0
  %v573 = vadd.f32 %v191, %v572
  %574 = vmatprep.mubr.f32.mxu0 0.0
  %575 = vmatmul.mubr.f32.gmra.mrb[0].mxu0 %v299
  %v576 = vpop.f32.mrb[0].mxu0
  %v577 = vadd.f32 %v194, %v576
  %v578 = vpop.f32.mrb[0].mxu0
  %v579 = vadd.f32 %v195, %v578
  %580 = vmatprep.mubr.f32.mxu0 0.0
  %581 = vmatmul.mubr.f32.gmra.mrb[0].mxu0 %v302
  %v582 = vpop.f32.mrb[0].mxu0
  %v583 = vadd.f32 %v198, %v582
  %v584 = vpop.f32.mrb[0].mxu0
  %v585 = vadd.f32 %v199, %v584
  %586 = vmatprep.mubr.f32.mxu0 0.0
  %587 = vmatmul.mubr.f32.gmra.mrb[0].mxu0 %v305
  %v588 = vpop.f32.mrb[0].mxu0
  %v589 = vadd.f32 %v202, %v588
  %v590 = vpop.f32.mrb[0].mxu0
  %v591 = vadd.f32 %v203, %v590
  %592 = vmatprep.mubr.f32.mxu0 0.0
  %593 = vmatmul.mubr.f32.gmra.mrb[0].mxu0 %v308
  %v594 = vpop.f32.mrb[0].mxu0
  %v595 = vadd.f32 %v206, %v594
  %v596 = vpop.f32.mrb[0].mxu0
  %v597 = vadd.f32 %v207, %v596
  %598 = vmatprep.mubr.f32.mxu0 0.0
  %599 = vmatmul.mubr.f32.gmra.mrb[0].mxu0 %v311
  %v600 = vpop.f32.mrb[0].mxu0
  %v601 = vadd.f32 %v210, %v600
  %v602 = vpop.f32.mrb[0].mxu0
  %v603 = vadd.f32 %v211, %v602
  %604 = vmatprep.mubr.f32.mxu0 0.0
  %605 = vmatmul.mubr.f32.gmra.mrb[0].mxu0 %v314
  %v606 = vpop.f32.mrb[0].mxu0
  %v607 = vadd.f32 %v214, %v606
  %v608 = vpop.f32.mrb[0].mxu0
  %v609 = vadd.f32 %v215, %v608
  %610 = vmatprep.mubr.f32.mxu0 0.0
  %611 = vmatmul.mubr.f32.gmra.mrb[0].mxu0 %v317
  %v612 = vpop.f32.mrb[0].mxu0
  %v613 = vadd.f32 %v218, %v612
  %v614 = vpop.f32.mrb[0].mxu0
  %v615 = vadd.f32 %v219, %v614
  %616 = vmatprep.mubr.f32.mxu0 0.0
  %617 = vmatmul.mubr.f32.gmra.mrb[0].mxu0 %v320
  %v618 = vpop.f32.mrb[0].mxu0
  %v619 = vadd.f32 %v222, %v618
  %v620 = vpop.f32.mrb[0].mxu0
  %v621 = vadd.f32 %v223, %v620
  %622 = vmatprep.mubr.f32.mxu0 0.0
  %623 = vmatmul.mubr.f32.gmra.mrb[0].mxu0 %v323
  %v624 = vpop.f32.mrb[0].mxu0
  %v625 = vadd.f32 %v226, %v624
  %v626 = vpop.f32.mrb[0].mxu0
  %v627 = vadd.f32 %v227, %v626
  %628 = vmatprep.mubr.f32.mxu0 0.0
  %629 = vmatmul.mubr.f32.gmra.mrb[0].mxu0 %v326
  %v630 = vpop.f32.mrb[0].mxu0
  %v631 = vadd.f32 %v230, %v630
  %v632 = vpop.f32.mrb[0].mxu0
  %v633 = vadd.f32 %v231, %v632
  %634 = vmatprep.mubr.f32.mxu0 0.0
  %635 = vmatmul.mubr.f32.gmra.mrb[0].mxu0 %v329
  %v636 = vpop.f32.mrb[0].mxu0
  %v637 = vadd.f32 %v234, %v636
  %v638 = vpop.f32.mrb[0].mxu0
  %v639 = vadd.f32 %v235, %v638
  %640 = vmatprep.mubr.f32.mxu0 0.0
  %641 = vmatmul.mubr.f32.gmra.mrb[0].mxu0 %v332
  %v642 = vpop.f32.mrb[0].mxu0
  %v643 = vadd.f32 %v238, %v642
  %v644 = vpop.f32.mrb[0].mxu0
  %v645 = vadd.f32 %v239, %v644
  %646 = vmatprep.mubr.f32.mxu0 0.0
  %647 = vmatmul.mubr.f32.gmra.mrb[0].mxu0 %v335
  %v648 = vpop.f32.mrb[0].mxu0
  %v649 = vadd.f32 %v242, %v648
  %v650 = vpop.f32.mrb[0].mxu0
  %v651 = vadd.f32 %v243, %v650
  %652 = vmatprep.mubr.f32.mxu0 0.0
  %653 = vmatmul.mubr.f32.gmra.mrb[0].mxu0 %v338
  %v654 = vpop.f32.mrb[0].mxu0
  %v655 = vadd.f32 %v246, %v654
  %v656 = vpop.f32.mrb[0].mxu0
  %v657 = vadd.f32 %v247, %v656
  %658 = vmatprep.mubr.f32.mxu0 0.0
  %659 = vmatmul.mubr.f32.gmra.mrb[0].mxu0 %v341
  %v660 = vpop.f32.mrb[0].mxu0
  %v661 = vadd.f32 %v250, %v660
  %v662 = vpop.f32.mrb[0].mxu0
  %v663 = vadd.f32 %v251, %v662
  %664 = vdwg.mxu0
  %v665 = vmax.f32 %v410, 0.0
  %v666 = vmax.f32 %v412, 0.0
  %v667 = vmax.f32 %v571, 0.0
  %v668 = vmax.f32 %v573, 0.0
  %v669 = vmax.f32 %v416, 0.0
  %v670 = vmax.f32 %v418, 0.0
  %v671 = vmax.f32 %v577, 0.0
  %v672 = vmax.f32 %v579, 0.0
  %v673 = vmax.f32 %v422, 0.0
  %v674 = vmax.f32 %v424, 0.0
  %v675 = vmax.f32 %v583, 0.0
  %v676 = vmax.f32 %v585, 0.0
  %v677 = vmax.f32 %v428, 0.0
  %v678 = vmax.f32 %v430, 0.0
  %v679 = vmax.f32 %v589, 0.0
  %v680 = vmax.f32 %v591, 0.0
  %v681 = vmax.f32 %v434, 0.0
  %v682 = vmax.f32 %v436, 0.0
  %v683 = vmax.f32 %v595, 0.0
  %v684 = vmax.f32 %v597, 0.0
  %v685 = vmax.f32 %v440, 0.0
  %v686 = vmax.f32 %v442, 0.0
  %v687 = vmax.f32 %v601, 0.0
  %v688 = vmax.f32 %v603, 0.0
  %v689 = vmax.f32 %v446, 0.0
  %v690 = vmax.f32 %v448, 0.0
  %v691 = vmax.f32 %v607, 0.0
  %v692 = vmax.f32 %v609, 0.0
  %v693 = vmax.f32 %v452, 0.0
  %v694 = vmax.f32 %v454, 0.0
  %v695 = vmax.f32 %v613, 0.0
  %v696 = vmax.f32 %v615, 0.0
  %v697 = vmax.f32 %v458, 0.0
  %v698 = vmax.f32 %v460, 0.0
  %v699 = vmax.f32 %v619, 0.0
  %v700 = vmax.f32 %v621, 0.0
  %v701 = vmax.f32 %v464, 0.0
  %v702 = vmax.f32 %v466, 0.0
  %v703 = vmax.f32 %v625, 0.0
  %v704 = vmax.f32 %v627, 0.0
  %v705 = vmax.f32 %v470, 0.0
  %v706 = vmax.f32 %v472, 0.0
  %v707 = vmax.f32 %v631, 0.0
  %v708 = vmax.f32 %v633, 0.0
  %v709 = vmax.f32 %v476, 0.0
  %v710 = vmax.f32 %v478, 0.0
  %v711 = vmax.f32 %v637, 0.0
  %v712 = vmax.f32 %v639, 0.0
  %v713 = vmax.f32 %v482, 0.0
  %v714 = vmax.f32 %v484, 0.0
  %v715 = vmax.f32 %v643, 0.0
  %v716 = vmax.f32 %v645, 0.0
  %v717 = vmax.f32 %v488, 0.0
  %v718 = vmax.f32 %v490, 0.0
  %v719 = vmax.f32 %v649, 0.0
  %v720 = vmax.f32 %v651, 0.0
  %v721 = vmax.f32 %v494, 0.0
  %v722 = vmax.f32 %v496, 0.0
  %v723 = vmax.f32 %v655, 0.0
  %v724 = vmax.f32 %v657, 0.0
  %v725 = vmax.f32 %v500, 0.0
  %v726 = vmax.f32 %v502, 0.0
  %v727 = vmax.f32 %v661, 0.0
  %v728 = vmax.f32 %v663, 0.0
  %v729 = vld [vmem:[%s6] sm:$0xff]
  %v730 = vld [vmem:[%s6 + $0x8] sm:$0xff]
  %v731 = vld [vmem:[%s6 + $0x10] sm:$0xff]
  %v732 = vld [vmem:[%s6 + $0x18] sm:$0xff]
  %v734 = vsel %vm294, %v30, 0
  %v737 = vsel %vm294, %v31, 0
  %v740 = vsel %vm294, %v32, 0
  %v743 = vsel %vm294, %v33, 0
  %v746 = vsel %vm294, %v34, 0
  %v749 = vsel %vm294, %v35, 0
  %v752 = vsel %vm294, %v36, 0
  %v755 = vsel %vm294, %v37, 0
  %v758 = vsel %vm294, %v38, 0
  %v761 = vsel %vm294, %v39, 0
  %v764 = vsel %vm294, %v40, 0
  %v767 = vsel %vm294, %v41, 0
  %v770 = vsel %vm294, %v42, 0
  %v773 = vsel %vm294, %v43, 0
  %v776 = vsel %vm294, %v44, 0
  %v779 = vsel %vm294, %v45, 0
  %781 = vmatprep.subr.mxu0 0.0
  %782 = vmatpush1.msra.mxu0 %v729
  %783 = vmatprep.subr.mxu0 0.0
  %784 = vmatpush1.msra.mxu0 %v730
  %785 = vmatprep.subr.mxu0 0.0
  %786 = vmatpush1.msra.mxu0 %v731
  %787 = vmatprep.subr.mxu0 0.0
  %788 = vmatpush1.msra.mxu0 %v732
  %789 = vmatprep.subr.mxu0 0.0
  %790 = vmatpush1.msra.mxu0 0.0
  %791 = vmatprep.subr.mxu0 0.0
  %792 = vmatpush1.msra.mxu0 0.0
  %793 = vmatprep.subr.mxu0 0.0
  %794 = vmatpush1.msra.mxu0 0.0
  %795 = vmatprep.subr.mxu0 0.0
  %796 = vmatpush1.msra.mxu0 0.0
  %797 = vmatprep.subr.mxu0 0.0
  %798 = vmatpush1.msra.mxu0 0.0
  %799 = vmatprep.subr.mxu0 0.0
  %800 = vmatpush1.msra.mxu0 0.0
  %801 = vmatprep.subr.mxu0 0.0
  %802 = vmatpush1.msra.mxu0 0.0
  %803 = vmatprep.subr.mxu0 0.0
  %804 = vmatpush1.msra.mxu0 0.0
  %805 = vmatprep.subr.mxu0 0.0
  %806 = vmatpush1.msra.mxu0 0.0
  %807 = vmatprep.subr.mxu0 0.0
  %808 = vmatpush1.msra.mxu0 0.0
  %809 = vmatprep.subr.mxu0 0.0
  %810 = vmatpush1.msra.mxu0 0.0
  %811 = vmatprep.subr.mxu0 0.0
  %812 = vmatpush1.msra.mxu0 0.0
  %813 = vmatprep.subr.mxu0 0.0
  %814 = vmatpush1.msra.mxu0 0.0
  %815 = vmatprep.subr.mxu0 0.0
  %816 = vmatpush1.msra.mxu0 0.0
  %817 = vmatprep.subr.mxu0 0.0
  %818 = vmatpush1.msra.mxu0 0.0
  %819 = vmatprep.subr.mxu0 0.0
  %820 = vmatpush1.msra.mxu0 0.0
  %821 = vmatprep.subr.mxu0 0.0
  %822 = vmatpush1.msra.mxu0 0.0
  %823 = vmatprep.subr.mxu0 0.0
  %824 = vmatpush1.msra.mxu0 0.0
  %825 = vmatprep.subr.mxu0 0.0
  %826 = vmatpush1.msra.mxu0 0.0
  %827 = vmatprep.subr.mxu0 0.0
  %828 = vmatpush1.msra.mxu0 0.0
  %829 = vmatprep.subr.mxu0 0.0
  %830 = vmatpush1.msra.mxu0 0.0
  %831 = vmatprep.subr.mxu0 0.0
  %832 = vmatpush1.msra.mxu0 0.0
  %833 = vmatprep.subr.mxu0 0.0
  %834 = vmatpush1.msra.mxu0 0.0
  %835 = vmatprep.subr.mxu0 0.0
  %836 = vmatpush1.msra.mxu0 0.0
  %837 = vmatprep.subr.mxu0 0.0
  %838 = vmatpush1.msra.mxu0 0.0
  %839 = vmatprep.subr.mxu0 0.0
  %840 = vmatpush1.msra.mxu0 0.0
  %841 = vmatprep.subr.mxu0 0.0
  %842 = vmatpush1.msra.mxu0 0.0
  %843 = vmatprep.subr.mxu0 0.0
  %844 = vmatpush1.msra.mxu0 0.0
  %845 = vmatprep.mubr.f32.mxu0 0.0
  %846 = vmatmul.mubr.f32.gmra.mrb[0].mxu0 %v734
  %v847 = vpop.f32.mrb[0].mxu0
  %v848 = vadd.f32 %v262, %v847
  %v849 = vpop.f32.mrb[0].mxu0
  %850 = vmatprep.mubr.f32.mxu0 0.0
  %851 = vmatmul.mubr.f32.gmra.mrb[0].mxu0 %v737
  %v852 = vpop.f32.mrb[0].mxu0
  %v853 = vadd.f32 %v263, %v852
  %v854 = vpop.f32.mrb[0].mxu0
  %855 = vmatprep.mubr.f32.mxu0 0.0
  %856 = vmatmul.mubr.f32.gmra.mrb[0].mxu0 %v740
  %v857 = vpop.f32.mrb[0].mxu0
  %v858 = vadd.f32 %v264, %v857
  %v859 = vpop.f32.mrb[0].mxu0
  %860 = vmatprep.mubr.f32.mxu0 0.0
  %861 = vmatmul.mubr.f32.gmra.mrb[0].mxu0 %v743
  %v862 = vpop.f32.mrb[0].mxu0
  %v863 = vadd.f32 %v265, %v862
  %v864 = vpop.f32.mrb[0].mxu0
  %865 = vmatprep.mubr.f32.mxu0 0.0
  %866 = vmatmul.mubr.f32.gmra.mrb[0].mxu0 %v746
  %v867 = vpop.f32.mrb[0].mxu0
  %v868 = vadd.f32 %v266, %v867
  %v869 = vpop.f32.mrb[0].mxu0
  %870 = vmatprep.mubr.f32.mxu0 0.0
  %871 = vmatmul.mubr.f32.gmra.mrb[0].mxu0 %v749
  %v872 = vpop.f32.mrb[0].mxu0
  %v873 = vadd.f32 %v267, %v872
  %v874 = vpop.f32.mrb[0].mxu0
  %875 = vmatprep.mubr.f32.mxu0 0.0
  %876 = vmatmul.mubr.f32.gmra.mrb[0].mxu0 %v752
  %v877 = vpop.f32.mrb[0].mxu0
  %v878 = vadd.f32 %v268, %v877
  %v879 = vpop.f32.mrb[0].mxu0
  %880 = vmatprep.mubr.f32.mxu0 0.0
  %881 = vmatmul.mubr.f32.gmra.mrb[0].mxu0 %v755
  %v882 = vpop.f32.mrb[0].mxu0
  %v883 = vadd.f32 %v269, %v882
  %v884 = vpop.f32.mrb[0].mxu0
  %885 = vmatprep.mubr.f32.mxu0 0.0
  %886 = vmatmul.mubr.f32.gmra.mrb[0].mxu0 %v758
  %v887 = vpop.f32.mrb[0].mxu0
  %v888 = vadd.f32 %v270, %v887
  %v889 = vpop.f32.mrb[0].mxu0
  %890 = vmatprep.mubr.f32.mxu0 0.0
  %891 = vmatmul.mubr.f32.gmra.mrb[0].mxu0 %v761
  %v892 = vpop.f32.mrb[0].mxu0
  %v893 = vadd.f32 %v271, %v892
  %v894 = vpop.f32.mrb[0].mxu0
  %895 = vmatprep.mubr.f32.mxu0 0.0
  %896 = vmatmul.mubr.f32.gmra.mrb[0].mxu0 %v764
  %v897 = vpop.f32.mrb[0].mxu0
  %v898 = vadd.f32 %v272, %v897
  %v899 = vpop.f32.mrb[0].mxu0
  %900 = vmatprep.mubr.f32.mxu0 0.0
  %901 = vmatmul.mubr.f32.gmra.mrb[0].mxu0 %v767
  %v902 = vpop.f32.mrb[0].mxu0
  %v903 = vadd.f32 %v273, %v902
  %v904 = vpop.f32.mrb[0].mxu0
  %905 = vmatprep.mubr.f32.mxu0 0.0
  %906 = vmatmul.mubr.f32.gmra.mrb[0].mxu0 %v770
  %v907 = vpop.f32.mrb[0].mxu0
  %v908 = vadd.f32 %v274, %v907
  %v909 = vpop.f32.mrb[0].mxu0
  %910 = vmatprep.mubr.f32.mxu0 0.0
  %911 = vmatmul.mubr.f32.gmra.mrb[0].mxu0 %v773
  %v912 = vpop.f32.mrb[0].mxu0
  %v913 = vadd.f32 %v275, %v912
  %v914 = vpop.f32.mrb[0].mxu0
  %915 = vmatprep.mubr.f32.mxu0 0.0
  %916 = vmatmul.mubr.f32.gmra.mrb[0].mxu0 %v776
  %v917 = vpop.f32.mrb[0].mxu0
  %v918 = vadd.f32 %v276, %v917
  %v919 = vpop.f32.mrb[0].mxu0
  %920 = vmatprep.mubr.f32.mxu0 0.0
  %921 = vmatmul.mubr.f32.gmra.mrb[0].mxu0 %v779
  %v922 = vpop.f32.mrb[0].mxu0
  %v923 = vadd.f32 %v277, %v922
  %v924 = vpop.f32.mrb[0].mxu0
  %925 = vdwg.mxu0
  %v926 = vld [vmem:[%s7] sm:$0xff]
  %v927 = vld [vmem:[%s7 + $0x8] sm:$0xff]
  %v928 = vld [vmem:[%s7 + $0x10] sm:$0xff]
  %v929 = vld [vmem:[%s7 + $0x18] sm:$0xff]
  %v930 = vld [vmem:[%s7 + $0x20] sm:$0xff]
  %v931 = vld [vmem:[%s7 + $0x28] sm:$0xff]
  %v932 = vld [vmem:[%s7 + $0x30] sm:$0xff]
  %v933 = vld [vmem:[%s7 + $0x38] sm:$0xff]
  %v934 = vld [vmem:[%s7 + $0x40] sm:$0xff]
  %v935 = vld [vmem:[%s7 + $0x48] sm:$0xff]
  %v936 = vld [vmem:[%s7 + $0x50] sm:$0xff]
  %v937 = vld [vmem:[%s7 + $0x58] sm:$0xff]
  %v938 = vld [vmem:[%s7 + $0x60] sm:$0xff]
  %v939 = vld [vmem:[%s7 + $0x68] sm:$0xff]
  %v940 = vld [vmem:[%s7 + $0x70] sm:$0xff]
  %v941 = vld [vmem:[%s7 + $0x78] sm:$0xff]
  %v942 = vld [vmem:[%s7 + $0x80] sm:$0xff]
  %v943 = vld [vmem:[%s7 + $0x88] sm:$0xff]
  %v944 = vld [vmem:[%s7 + $0x90] sm:$0xff]
  %v945 = vld [vmem:[%s7 + $0x98] sm:$0xff]
  %v946 = vld [vmem:[%s7 + $0xa0] sm:$0xff]
  %v947 = vld [vmem:[%s7 + $0xa8] sm:$0xff]
  %v948 = vld [vmem:[%s7 + $0xb0] sm:$0xff]
  %v949 = vld [vmem:[%s7 + $0xb8] sm:$0xff]
  %v950 = vld [vmem:[%s7 + $0xc0] sm:$0xff]
  %v951 = vld [vmem:[%s7 + $0xc8] sm:$0xff]
  %v952 = vld [vmem:[%s7 + $0xd0] sm:$0xff]
  %v953 = vld [vmem:[%s7 + $0xd8] sm:$0xff]
  %v954 = vld [vmem:[%s7 + $0xe0] sm:$0xff]
  %v955 = vld [vmem:[%s7 + $0xe8] sm:$0xff]
  %v956 = vld [vmem:[%s7 + $0xf0] sm:$0xff]
  %v957 = vld [vmem:[%s7 + $0xf8] sm:$0xff]
  %v958 = vld [vmem:[%s7 + $0x100] sm:$0xff]
  %v959 = vld [vmem:[%s7 + $0x108] sm:$0xff]
  %v960 = vld [vmem:[%s7 + $0x110] sm:$0xff]
  %v961 = vld [vmem:[%s7 + $0x118] sm:$0xff]
  %v962 = vld [vmem:[%s7 + $0x120] sm:$0xff]
  %v963 = vld [vmem:[%s7 + $0x128] sm:$0xff]
  %v964 = vld [vmem:[%s7 + $0x130] sm:$0xff]
  %v965 = vld [vmem:[%s7 + $0x138] sm:$0xff]
  %v966 = vld [vmem:[%s7 + $0x140] sm:$0xff]
  %v967 = vld [vmem:[%s7 + $0x148] sm:$0xff]
  %v968 = vld [vmem:[%s7 + $0x150] sm:$0xff]
  %v969 = vld [vmem:[%s7 + $0x158] sm:$0xff]
  %v970 = vld [vmem:[%s7 + $0x160] sm:$0xff]
  %v971 = vld [vmem:[%s7 + $0x168] sm:$0xff]
  %v972 = vld [vmem:[%s7 + $0x170] sm:$0xff]
  %v973 = vld [vmem:[%s7 + $0x178] sm:$0xff]
  %v974 = vld [vmem:[%s7 + $0x180] sm:$0xff]
  %v975 = vld [vmem:[%s7 + $0x188] sm:$0xff]
  %v976 = vld [vmem:[%s7 + $0x190] sm:$0xff]
  %v977 = vld [vmem:[%s7 + $0x198] sm:$0xff]
  %v979 = vsel %vm294, %v668, 0
  %v982 = vsel %vm294, %v672, 0
  %v985 = vsel %vm294, %v676, 0
  %v988 = vsel %vm294, %v680, 0
  %v991 = vsel %vm294, %v684, 0
  %v994 = vsel %vm294, %v688, 0
  %v997 = vsel %vm294, %v692, 0
  %v1000 = vsel %vm294, %v696, 0
  %v1003 = vsel %vm294, %v700, 0
  %v1006 = vsel %vm294, %v704, 0
  %v1009 = vsel %vm294, %v708, 0
  %v1012 = vsel %vm294, %v712, 0
  %v1015 = vsel %vm294, %v716, 0
  %v1018 = vsel %vm294, %v720, 0
  %v1021 = vsel %vm294, %v724, 0
  %v1024 = vsel %vm294, %v728, 0
  %1026 = vmatprep.subr.mxu0 0.0
  %1027 = vmatpush1.msra.mxu0 %v926
  %1028 = vmatprep.subr.mxu0 0.0
  %1029 = vmatpush1.msra.mxu0 %v927
  %1030 = vmatprep.subr.mxu0 0.0
  %1031 = vmatpush1.msra.mxu0 %v928
  %1032 = vmatprep.subr.mxu0 0.0
  %1033 = vmatpush1.msra.mxu0 %v929
  %1034 = vmatprep.subr.mxu0 0.0
  %1035 = vmatpush1.msra.mxu0 %v930
  %1036 = vmatprep.subr.mxu0 0.0
  %1037 = vmatpush1.msra.mxu0 %v931
  %1038 = vmatprep.subr.mxu0 0.0
  %1039 = vmatpush1.msra.mxu0 %v932
  %1040 = vmatprep.subr.mxu0 0.0
  %1041 = vmatpush1.msra.mxu0 %v933
  %1042 = vmatprep.subr.mxu0 0.0
  %1043 = vmatpush1.msra.mxu0 %v934
  %1044 = vmatprep.subr.mxu0 0.0
  %1045 = vmatpush1.msra.mxu0 %v935
  %1046 = vmatprep.subr.mxu0 0.0
  %1047 = vmatpush1.msra.mxu0 %v936
  %1048 = vmatprep.subr.mxu0 0.0
  %1049 = vmatpush1.msra.mxu0 %v937
  %1050 = vmatprep.subr.mxu0 0.0
  %1051 = vmatpush1.msra.mxu0 %v938
  %1052 = vmatprep.subr.mxu0 0.0
  %1053 = vmatpush1.msra.mxu0 %v939
  %1054 = vmatprep.subr.mxu0 0.0
  %1055 = vmatpush1.msra.mxu0 %v940
  %1056 = vmatprep.subr.mxu0 0.0
  %1057 = vmatpush1.msra.mxu0 %v941
  %1058 = vmatprep.subr.mxu0 0.0
  %1059 = vmatpush1.msra.mxu0 %v942
  %1060 = vmatprep.subr.mxu0 0.0
  %1061 = vmatpush1.msra.mxu0 %v943
  %1062 = vmatprep.subr.mxu0 0.0
  %1063 = vmatpush1.msra.mxu0 %v944
  %1064 = vmatprep.subr.mxu0 0.0
  %1065 = vmatpush1.msra.mxu0 %v945
  %1066 = vmatprep.subr.mxu0 0.0
  %1067 = vmatpush1.msra.mxu0 %v946
  %1068 = vmatprep.subr.mxu0 0.0
  %1069 = vmatpush1.msra.mxu0 %v947
  %1070 = vmatprep.subr.mxu0 0.0
  %1071 = vmatpush1.msra.mxu0 %v948
  %1072 = vmatprep.subr.mxu0 0.0
  %1073 = vmatpush1.msra.mxu0 %v949
  %1074 = vmatprep.subr.mxu0 0.0
  %1075 = vmatpush1.msra.mxu0 %v950
  %1076 = vmatprep.subr.mxu0 0.0
  %1077 = vmatpush1.msra.mxu0 %v951
  %1078 = vmatprep.subr.mxu0 0.0
  %1079 = vmatpush1.msra.mxu0 %v952
  %1080 = vmatprep.subr.mxu0 0.0
  %1081 = vmatpush1.msra.mxu0 %v953
  %1082 = vmatprep.subr.mxu0 0.0
  %1083 = vmatpush1.msra.mxu0 %v954
  %1084 = vmatprep.subr.mxu0 0.0
  %1085 = vmatpush1.msra.mxu0 %v955
  %1086 = vmatprep.subr.mxu0 0.0
  %1087 = vmatpush1.msra.mxu0 %v956
  %1088 = vmatprep.subr.mxu0 0.0
  %1089 = vmatpush1.msra.mxu0 %v957
  %1090 = vmatprep.mubr.f32.mxu0 %v666
  %1091 = vmatmul.mubr.f32.gmra.mrb[0].mxu0 %v665
  %v1092 = vpop.f32.mrb[0].mxu0
  %v1093 = vadd.f32 0.0, %v1092
  %v1094 = vpop.f32.mrb[0].mxu0
  %1095 = vmatprep.mubr.f32.mxu0 %v670
  %1096 = vmatmul.mubr.f32.gmra.mrb[0].mxu0 %v669
  %v1097 = vpop.f32.mrb[0].mxu0
  %v1098 = vadd.f32 0.0, %v1097
  %v1099 = vpop.f32.mrb[0].mxu0
  %1100 = vmatprep.mubr.f32.mxu0 %v674
  %1101 = vmatmul.mubr.f32.gmra.mrb[0].mxu0 %v673
  %v1102 = vpop.f32.mrb[0].mxu0
  %v1103 = vadd.f32 0.0, %v1102
  %v1104 = vpop.f32.mrb[0].mxu0
  %1105 = vmatprep.mubr.f32.mxu0 %v678
  %1106 = vmatmul.mubr.f32.gmra.mrb[0].mxu0 %v677
  %v1107 = vpop.f32.mrb[0].mxu0
  %v1108 = vadd.f32 0.0, %v1107
  %v1109 = vpop.f32.mrb[0].mxu0
  %1110 = vmatprep.mubr.f32.mxu0 %v682
  %1111 = vmatmul.mubr.f32.gmra.mrb[0].mxu0 %v681
  %v1112 = vpop.f32.mrb[0].mxu0
  %v1113 = vadd.f32 0.0, %v1112
  %v1114 = vpop.f32.mrb[0].mxu0
  %1115 = vmatprep.mubr.f32.mxu0 %v686
  %1116 = vmatmul.mubr.f32.gmra.mrb[0].mxu0 %v685
  %v1117 = vpop.f32.mrb[0].mxu0
  %v1118 = vadd.f32 0.0, %v1117
  %v1119 = vpop.f32.mrb[0].mxu0
  %1120 = vmatprep.mubr.f32.mxu0 %v690
  %1121 = vmatmul.mubr.f32.gmra.mrb[0].mxu0 %v689
  %v1122 = vpop.f32.mrb[0].mxu0
  %v1123 = vadd.f32 0.0, %v1122
  %v1124 = vpop.f32.mrb[0].mxu0
  %1125 = vmatprep.mubr.f32.mxu0 %v694
  %1126 = vmatmul.mubr.f32.gmra.mrb[0].mxu0 %v693
  %v1127 = vpop.f32.mrb[0].mxu0
  %v1128 = vadd.f32 0.0, %v1127
  %v1129 = vpop.f32.mrb[0].mxu0
  %1130 = vmatprep.mubr.f32.mxu0 %v698
  %1131 = vmatmul.mubr.f32.gmra.mrb[0].mxu0 %v697
  %v1132 = vpop.f32.mrb[0].mxu0
  %v1133 = vadd.f32 0.0, %v1132
  %v1134 = vpop.f32.mrb[0].mxu0
  %1135 = vmatprep.mubr.f32.mxu0 %v702
  %1136 = vmatmul.mubr.f32.gmra.mrb[0].mxu0 %v701
  %v1137 = vpop.f32.mrb[0].mxu0
  %v1138 = vadd.f32 0.0, %v1137
  %v1139 = vpop.f32.mrb[0].mxu0
  %1140 = vmatprep.mubr.f32.mxu0 %v706
  %1141 = vmatmul.mubr.f32.gmra.mrb[0].mxu0 %v705
  %v1142 = vpop.f32.mrb[0].mxu0
  %v1143 = vadd.f32 0.0, %v1142
  %v1144 = vpop.f32.mrb[0].mxu0
  %1145 = vmatprep.mubr.f32.mxu0 %v710
  %1146 = vmatmul.mubr.f32.gmra.mrb[0].mxu0 %v709
  %v1147 = vpop.f32.mrb[0].mxu0
  %v1148 = vadd.f32 0.0, %v1147
  %v1149 = vpop.f32.mrb[0].mxu0
  %1150 = vmatprep.mubr.f32.mxu0 %v714
  %1151 = vmatmul.mubr.f32.gmra.mrb[0].mxu0 %v713
  %v1152 = vpop.f32.mrb[0].mxu0
  %v1153 = vadd.f32 0.0, %v1152
  %v1154 = vpop.f32.mrb[0].mxu0
  %1155 = vmatprep.mubr.f32.mxu0 %v718
  %1156 = vmatmul.mubr.f32.gmra.mrb[0].mxu0 %v717
  %v1157 = vpop.f32.mrb[0].mxu0
  %v1158 = vadd.f32 0.0, %v1157
  %v1159 = vpop.f32.mrb[0].mxu0
  %1160 = vmatprep.mubr.f32.mxu0 %v722
  %1161 = vmatmul.mubr.f32.gmra.mrb[0].mxu0 %v721
  %v1162 = vpop.f32.mrb[0].mxu0
  %v1163 = vadd.f32 0.0, %v1162
  %v1164 = vpop.f32.mrb[0].mxu0
  %1165 = vmatprep.mubr.f32.mxu0 %v726
  %1166 = vmatmul.mubr.f32.gmra.mrb[0].mxu0 %v725
  %v1167 = vpop.f32.mrb[0].mxu0
  %v1168 = vadd.f32 0.0, %v1167
  %v1169 = vpop.f32.mrb[0].mxu0
  %1170 = vdwg.mxu0
  %1171 = vmatprep.subr.mxu0 0.0
  %1172 = vmatpush1.msra.mxu0 %v958
  %1173 = vmatprep.subr.mxu0 0.0
  %1174 = vmatpush1.msra.mxu0 %v959
  %1175 = vmatprep.subr.mxu0 0.0
  %1176 = vmatpush1.msra.mxu0 %v960
  %1177 = vmatprep.subr.mxu0 0.0
  %1178 = vmatpush1.msra.mxu0 %v961
  %1179 = vmatprep.subr.mxu0 0.0
  %1180 = vmatpush1.msra.mxu0 %v962
  %1181 = vmatprep.subr.mxu0 0.0
  %1182 = vmatpush1.msra.mxu0 %v963
  %1183 = vmatprep.subr.mxu0 0.0
  %1184 = vmatpush1.msra.mxu0 %v964
  %1185 = vmatprep.subr.mxu0 0.0
  %1186 = vmatpush1.msra.mxu0 %v965
  %1187 = vmatprep.subr.mxu0 0.0
  %1188 = vmatpush1.msra.mxu0 %v966
  %1189 = vmatprep.subr.mxu0 0.0
  %1190 = vmatpush1.msra.mxu0 %v967
  %1191 = vmatprep.subr.mxu0 0.0
  %1192 = vmatpush1.msra.mxu0 %v968
  %1193 = vmatprep.subr.mxu0 0.0
  %1194 = vmatpush1.msra.mxu0 %v969
  %1195 = vmatprep.subr.mxu0 0.0
  %1196 = vmatpush1.msra.mxu0 %v970
  %1197 = vmatprep.subr.mxu0 0.0
  %1198 = vmatpush1.msra.mxu0 %v971
  %1199 = vmatprep.subr.mxu0 0.0
  %1200 = vmatpush1.msra.mxu0 %v972
  %1201 = vmatprep.subr.mxu0 0.0
  %1202 = vmatpush1.msra.mxu0 %v973
  %1203 = vmatprep.subr.mxu0 0.0
  %1204 = vmatpush1.msra.mxu0 %v974
  %1205 = vmatprep.subr.mxu0 0.0
  %1206 = vmatpush1.msra.mxu0 %v975
  %1207 = vmatprep.subr.mxu0 0.0
  %1208 = vmatpush1.msra.mxu0 %v976
  %1209 = vmatprep.subr.mxu0 0.0
  %1210 = vmatpush1.msra.mxu0 %v977
  %1211 = vmatprep.subr.mxu0 0.0
  %1212 = vmatpush1.msra.mxu0 0.0
  %1213 = vmatprep.subr.mxu0 0.0
  %1214 = vmatpush1.msra.mxu0 0.0
  %1215 = vmatprep.subr.mxu0 0.0
  %1216 = vmatpush1.msra.mxu0 0.0
  %1217 = vmatprep.subr.mxu0 0.0
  %1218 = vmatpush1.msra.mxu0 0.0
  %1219 = vmatprep.subr.mxu0 0.0
  %1220 = vmatpush1.msra.mxu0 0.0
  %1221 = vmatprep.subr.mxu0 0.0
  %1222 = vmatpush1.msra.mxu0 0.0
  %1223 = vmatprep.subr.mxu0 0.0
  %1224 = vmatpush1.msra.mxu0 0.0
  %1225 = vmatprep.subr.mxu0 0.0
  %1226 = vmatpush1.msra.mxu0 0.0
  %1227 = vmatprep.subr.mxu0 0.0
  %1228 = vmatpush1.msra.mxu0 0.0
  %1229 = vmatprep.subr.mxu0 0.0
  %1230 = vmatpush1.msra.mxu0 0.0
  %1231 = vmatprep.subr.mxu0 0.0
  %1232 = vmatpush1.msra.mxu0 0.0
  %1233 = vmatprep.subr.mxu0 0.0
  %1234 = vmatpush1.msra.mxu0 0.0
  %1235 = vmatprep.mubr.f32.mxu0 %v979
  %1236 = vmatmul.mubr.f32.gmra.mrb[0].mxu0 %v667
  %v1237 = vpop.f32.mrb[0].mxu0
  %v1238 = vadd.f32 %v1093, %v1237
  %v1239 = vpop.f32.mrb[0].mxu0
  %1240 = vmatprep.mubr.f32.mxu0 %v982
  %1241 = vmatmul.mubr.f32.gmra.mrb[0].mxu0 %v671
  %v1242 = vpop.f32.mrb[0].mxu0
  %v1243 = vadd.f32 %v1098, %v1242
  %v1244 = vpop.f32.mrb[0].mxu0
  %1245 = vmatprep.mubr.f32.mxu0 %v985
  %1246 = vmatmul.mubr.f32.gmra.mrb[0].mxu0 %v675
  %v1247 = vpop.f32.mrb[0].mxu0
  %v1248 = vadd.f32 %v1103, %v1247
  %v1249 = vpop.f32.mrb[0].mxu0
  %1250 = vmatprep.mubr.f32.mxu0 %v988
  %1251 = vmatmul.mubr.f32.gmra.mrb[0].mxu0 %v679
  %v1252 = vpop.f32.mrb[0].mxu0
  %v1253 = vadd.f32 %v1108, %v1252
  %v1254 = vpop.f32.mrb[0].mxu0
  %1255 = vmatprep.mubr.f32.mxu0 %v991
  %1256 = vmatmul.mubr.f32.gmra.mrb[0].mxu0 %v683
  %v1257 = vpop.f32.mrb[0].mxu0
  %v1258 = vadd.f32 %v1113, %v1257
  %v1259 = vpop.f32.mrb[0].mxu0
  %1260 = vmatprep.mubr.f32.mxu0 %v994
  %1261 = vmatmul.mubr.f32.gmra.mrb[0].mxu0 %v687
  %v1262 = vpop.f32.mrb[0].mxu0
  %v1263 = vadd.f32 %v1118, %v1262
  %v1264 = vpop.f32.mrb[0].mxu0
  %1265 = vmatprep.mubr.f32.mxu0 %v997
  %1266 = vmatmul.mubr.f32.gmra.mrb[0].mxu0 %v691
  %v1267 = vpop.f32.mrb[0].mxu0
  %v1268 = vadd.f32 %v1123, %v1267
  %v1269 = vpop.f32.mrb[0].mxu0
  %1270 = vmatprep.mubr.f32.mxu0 %v1000
  %1271 = vmatmul.mubr.f32.gmra.mrb[0].mxu0 %v695
  %v1272 = vpop.f32.mrb[0].mxu0
  %v1273 = vadd.f32 %v1128, %v1272
  %v1274 = vpop.f32.mrb[0].mxu0
  %1275 = vmatprep.mubr.f32.mxu0 %v1003
  %1276 = vmatmul.mubr.f32.gmra.mrb[0].mxu0 %v699
  %v1277 = vpop.f32.mrb[0].mxu0
  %v1278 = vadd.f32 %v1133, %v1277
  %v1279 = vpop.f32.mrb[0].mxu0
  %1280 = vmatprep.mubr.f32.mxu0 %v1006
  %1281 = vmatmul.mubr.f32.gmra.mrb[0].mxu0 %v703
  %v1282 = vpop.f32.mrb[0].mxu0
  %v1283 = vadd.f32 %v1138, %v1282
  %v1284 = vpop.f32.mrb[0].mxu0
  %1285 = vmatprep.mubr.f32.mxu0 %v1009
  %1286 = vmatmul.mubr.f32.gmra.mrb[0].mxu0 %v707
  %v1287 = vpop.f32.mrb[0].mxu0
  %v1288 = vadd.f32 %v1143, %v1287
  %v1289 = vpop.f32.mrb[0].mxu0
  %1290 = vmatprep.mubr.f32.mxu0 %v1012
  %1291 = vmatmul.mubr.f32.gmra.mrb[0].mxu0 %v711
  %v1292 = vpop.f32.mrb[0].mxu0
  %v1293 = vadd.f32 %v1148, %v1292
  %v1294 = vpop.f32.mrb[0].mxu0
  %1295 = vmatprep.mubr.f32.mxu0 %v1015
  %1296 = vmatmul.mubr.f32.gmra.mrb[0].mxu0 %v715
  %v1297 = vpop.f32.mrb[0].mxu0
  %v1298 = vadd.f32 %v1153, %v1297
  %v1299 = vpop.f32.mrb[0].mxu0
  %1300 = vmatprep.mubr.f32.mxu0 %v1018
  %1301 = vmatmul.mubr.f32.gmra.mrb[0].mxu0 %v719
  %v1302 = vpop.f32.mrb[0].mxu0
  %v1303 = vadd.f32 %v1158, %v1302
  %v1304 = vpop.f32.mrb[0].mxu0
  %1305 = vmatprep.mubr.f32.mxu0 %v1021
  %1306 = vmatmul.mubr.f32.gmra.mrb[0].mxu0 %v723
  %v1307 = vpop.f32.mrb[0].mxu0
  %v1308 = vadd.f32 %v1163, %v1307
  %v1309 = vpop.f32.mrb[0].mxu0
  %1310 = vmatprep.mubr.f32.mxu0 %v1024
  %1311 = vmatmul.mubr.f32.gmra.mrb[0].mxu0 %v727
  %v1312 = vpop.f32.mrb[0].mxu0
  %v1313 = vadd.f32 %v1168, %v1312
  %v1314 = vpop.f32.mrb[0].mxu0
  %1315 = vdwg.mxu0
  %v1316 = vadd.f32 %v848, %v1238
  %v1317 = vadd.f32 %v853, %v1243
  %v1318 = vadd.f32 %v858, %v1248
  %v1319 = vadd.f32 %v863, %v1253
  %v1320 = vadd.f32 %v868, %v1258
  %v1321 = vadd.f32 %v873, %v1263
  %v1322 = vadd.f32 %v878, %v1268
  %v1323 = vadd.f32 %v883, %v1273
  %v1324 = vadd.f32 %v888, %v1278
  %v1325 = vadd.f32 %v893, %v1283
  %v1326 = vadd.f32 %v898, %v1288
  %v1327 = vadd.f32 %v903, %v1293
  %v1328 = vadd.f32 %v908, %v1298
  %v1329 = vadd.f32 %v913, %v1303
  %v1330 = vadd.f32 %v918, %v1308
  %v1331 = vadd.f32 %v923, %v1313
  %s1332 = sld [smem:[#allocation2]]
  %v1333 = vsub.f32 %v1316, %v1324
  %v1334 = vsub.f32 %v1317, %v1325
  %v1335 = vsub.f32 %v1318, %v1326
  %v1336 = vsub.f32 %v1319, %v1327
  %v1337 = vsub.f32 %v1320, %v1328
  %v1338 = vsub.f32 %v1321, %v1329
  %v1339 = vsub.f32 %v1322, %v1330
  %v1340 = vsub.f32 %v1323, %v1331
  %v1341 = vstv %s1332
  %v1342 = vmul.f32 %v1341, %v1333
  %v1343 = vmul.f32 %v1341, %v1334
  %v1344 = vmul.f32 %v1341, %v1335
  %v1345 = vmul.f32 %v1341, %v1336
  %v1346 = vmul.f32 %v1341, %v1337
  %v1347 = vmul.f32 %v1341, %v1338
  %v1348 = vmul.f32 %v1341, %v1339
  %v1349 = vmul.f32 %v1341, %v1340
  %v1350 = vadd.f32 %v1324, %v1342
  %v1351 = vadd.f32 %v1325, %v1343
  %v1352 = vadd.f32 %v1326, %v1344
  %v1353 = vadd.f32 %v1327, %v1345
  %v1354 = vadd.f32 %v1328, %v1346
  %v1355 = vadd.f32 %v1329, %v1347
  %v1356 = vadd.f32 %v1330, %v1348
  %v1357 = vadd.f32 %v1331, %v1349
  %1358 = vst.msk [vmem:[%s8] sm:$0xff] %vm294, %v1350
  %1359 = vst.msk [vmem:[%s8 + $0x8] sm:$0xff] %vm294, %v1351
  %1360 = vst.msk [vmem:[%s8 + $0x10] sm:$0xff] %vm294, %v1352
  %1361 = vst.msk [vmem:[%s8 + $0x18] sm:$0xff] %vm294, %v1353
  %1362 = vst.msk [vmem:[%s8 + $0x20] sm:$0xff] %vm294, %v1354
  %1363 = vst.msk [vmem:[%s8 + $0x28] sm:$0xff] %vm294, %v1355
  %1364 = vst.msk [vmem:[%s8 + $0x30] sm:$0xff] %vm294, %v1356
  %1365 = vst.msk [vmem:[%s8 + $0x38] sm:$0xff] %vm294, %v1357
  // Predicated region
  $region34: #{tpu_custom_call.1} parent=0 // pred_check
    _
  $region35: #{tpu_custom_call.1} parent=0 // pred_check_branch
    %1367 = sbr.rel (0) target = $region37
  $region36: #{tpu_custom_call.1} parent=0 // pred_region
    _
  $region37: #{tpu_custom_call.1} parent=0 // pred_fallthru
    _
  // Predicated region
  $region38: #{tpu_custom_call.1} parent=0 // pred_check
    _
  $region39: #{tpu_custom_call.1} parent=0 // pred_check_branch
    %1369 = sbr.rel (0) target = $region41
  $region40: #{tpu_custom_call.1} parent=0 // pred_region
    _
  $region41: #{tpu_custom_call.1} parent=0 // pred_fallthru
    _

</llo_original>
